<compile_context>
chip_gen: v5e
topology: v5e:2x2
jax: 0.10.0
libtpu: 0.0.40
codegen_flags: <defaults>
</compile_context>

<pallas_src>
import math
import jax
import jax.numpy as jnp
from jax.experimental import pallas as pl
from jax.experimental.pallas import tpu as pltpu


# ----------------------------------------------------------------------------
# Kernel
# ----------------------------------------------------------------------------
def make_mha_kernel(num_heads: int, head_dim: int, seq_len: int,
                    embed_dim: int, batch_block: int, compute_dtype):
    H, D, S, E, Bb = num_heads, head_dim, seq_len, embed_dim, batch_block
    M = Bb * S  # rows per grid step for the projection matmuls

    def kernel(q_in_ref, k_in_ref, v_in_ref,
               wq_ref, bq_ref, wk_ref, bk_ref, wv_ref, bv_ref,
               wo_ref, bo_ref, o_ref, attn_ref):
        # ---- fused, full-width projections (scaling already folded into wq/bq)
        xq = q_in_ref[...].reshape(M, E).astype(compute_dtype)
        xk = k_in_ref[...].reshape(M, E).astype(compute_dtype)
        xv = v_in_ref[...].reshape(M, E).astype(compute_dtype)

        q = jnp.dot(xq, wq_ref[...], preferred_element_type=jnp.float32) + bq_ref[...]
        k = jnp.dot(xk, wk_ref[...], preferred_element_type=jnp.float32) + bk_ref[...]
        v = jnp.dot(xv, wv_ref[...], preferred_element_type=jnp.float32) + bv_ref[...]

        q3 = q.reshape(Bb, S, E)
        k3 = k.reshape(Bb, S, E)
        v3 = v.reshape(Bb, S, E)

        # ---- per-head attention, batched over the Bb batch elements
        for h in range(H):
            lo = h * D
            qh = q3[:, :, lo:lo + D].astype(compute_dtype)   # (Bb, S, D)
            kh = k3[:, :, lo:lo + D].astype(compute_dtype)
            vh = v3[:, :, lo:lo + D].astype(compute_dtype)

            # scores: contraction on D, no explicit transpose.  (Bb, S, S) f32
            s = jnp.einsum('bqd,bkd->bqk', qh, kh,
                           preferred_element_type=jnp.float32)

            # softmax in f32 (matches F.softmax(..., dtype=torch.float32));
            # divide moved onto the EUP via approximate reciprocal.
            s = s - jnp.max(s, axis=-1, keepdims=True)
            p = jnp.exp(s)
            p = p * pl.reciprocal(jnp.sum(p, axis=-1, keepdims=True), approx=True)

            # TODO(synk): dropout_module is identity for dropout=0.0; stochastic
            # dropout would use pltpu.prng_seed / prng_random_bits if needed.

            oh = jnp.einsum('bqk,bkd->bqd', p.astype(compute_dtype), vh,
                            preferred_element_type=jnp.float32)  # (Bb, S, D)

            # write head output into its lane range of the (M, E) scratch slab
            attn_ref[:, lo:lo + D] = oh.reshape(M, D)

        # ---- output projection
        attn = attn_ref[...].astype(compute_dtype)               # (M, E)
        out = jnp.dot(attn, wo_ref[...],
                      preferred_element_type=jnp.float32) + bo_ref[...]
        o_ref[...] = out.reshape(Bb, S, E).astype(o_ref.dtype)

    return kernel


# ----------------------------------------------------------------------------
# Parameter prep (done ONCE, outside the per-call wrapper)
# ----------------------------------------------------------------------------
def prepare_params(params, *, num_heads, compute_dtype=jnp.bfloat16):
    """Fold scaling into wq/bq, pre-transpose torch (out,in) weights to (in,out),
    and cast matmul operands to bf16 (biases stay f32 for the f32 accumulate)."""
    E = params["q_w"].shape[0]
    assert E % num_heads == 0
    scaling = (E // num_heads) ** (-0.5)
    f32 = jnp.float32
    return {
        "wq": (params["q_w"].T * scaling).astype(compute_dtype),
        "bq": (params["q_b"] * scaling).reshape(1, E).astype(f32),
        "wk": params["k_w"].T.astype(compute_dtype),
        "bk": params["k_b"].reshape(1, E).astype(f32),
        "wv": params["v_w"].T.astype(compute_dtype),
        "bv": params["v_b"].reshape(1, E).astype(f32),
        "wo": params["o_w"].T.astype(compute_dtype),
        "bo": params["o_b"].reshape(1, E).astype(f32),
    }


def _pick_batch_block(B: int, max_block: int = 8) -> int:
    """Largest divisor of B <= max_block; prefer >=2 grid steps (megacore)."""
    bb = 1
    for c in range(1, min(B, max_block) + 1):
        if B % c == 0:
            bb = c
    if B // bb < 2:  # keep a >=2-step parallel axis when possible (v7x 2 TCs)
        for c in range(bb, 0, -1):
            if B % c == 0 and B // c >= 2:
                bb = c
                break
    return bb


# ----------------------------------------------------------------------------
# Wrapper
# ----------------------------------------------------------------------------
def multihead_attention(query, key, value, prep, *, num_heads,
                        batch_block=None, vmem_limit_bytes=48 * 1024 * 1024):
    """query/key/value: [B, S, E] float32. prep: output of prepare_params."""
    B, S, E = query.shape
    head_dim = E // num_heads
    compute_dtype = prep["wq"].dtype

    Bb = batch_block if batch_block is not None else _pick_batch_block(B)
    assert B % Bb == 0
    grid = (B // Bb,)

    kernel = make_mha_kernel(num_heads, head_dim, S, E, Bb, compute_dtype)

    x_spec = pl.BlockSpec((Bb, S, E), lambda b: (b, 0, 0))
    # grid-invariant weights/biases: whole array resident in VMEM once
    # (no per-step DMA, no double-buffered copies).
    w_spec = pl.BlockSpec(memory_space=pltpu.MemorySpace.VMEM)

    return pl.pallas_call(
        kernel,
        out_shape=jax.ShapeDtypeStruct((B, S, E), query.dtype),
        grid_spec=pltpu.PrefetchScalarGridSpec(
            num_scalar_prefetch=0,
            grid=grid,
            in_specs=[x_spec, x_spec, x_spec,
                      w_spec, w_spec, w_spec, w_spec,
                      w_spec, w_spec, w_spec, w_spec],
            out_specs=x_spec,
            scratch_shapes=[pltpu.VMEM((Bb * S, E), jnp.float32)],
        ),
        compiler_params=pltpu.CompilerParams(
            dimension_semantics=("parallel",),
            vmem_limit_bytes=vmem_limit_bytes),
    )(query, key, value,
      prep["wq"], prep["bq"], prep["wk"], prep["bk"],
      prep["wv"], prep["bv"], prep["wo"], prep["bo"])


# ----------------------------------------------------------------------------
# Synthetic params + pure-JAX reference (mirrors the PyTorch module)
# ----------------------------------------------------------------------------
def init_params(key, embed_dim):
    """Deterministic synthetic parameters (torch Linear layout: W is (out, in))."""
    ks = jax.random.split(key, 8)
    gain = 1.0 / math.sqrt(2.0)
    bound = math.sqrt(6.0 / (embed_dim + embed_dim))  # xavier_uniform bound

    def xavier(k, g):
        return jax.random.uniform(k, (embed_dim, embed_dim), jnp.float32,
                                  -g * bound, g * bound)

    return {
        "q_w": xavier(ks[0], gain),
        "k_w": xavier(ks[1], gain),
        "v_w": xavier(ks[2], gain),
        "o_w": xavier(ks[3], 1.0),
        "q_b": jax.random.normal(ks[4], (embed_dim,), jnp.float32) * 0.02,
        "k_b": jax.random.normal(ks[5], (embed_dim,), jnp.float32) * 0.02,
        "v_b": jax.random.normal(ks[6], (embed_dim,), jnp.float32) * 0.02,
        "o_b": jnp.zeros((embed_dim,), jnp.float32),
    }


def reference_mha(query, key, value, params, *, num_heads):
    """Pure-JAX f32 reference mirroring the PyTorch module, for verification."""
    B, S, E = query.shape
    D = E // num_heads
    scaling = D ** (-0.5)

    def lin(x, w, b):
        return x @ w.T + b

    q = lin(query, params["q_w"], params["q_b"]) * scaling
    k = lin(key, params["k_w"], params["k_b"])
    v = lin(value, params["v_w"], params["v_b"])

    def split(x):
        return x.reshape(B, S, num_heads, D).transpose(0, 2, 1, 3).reshape(B * num_heads, S, D)

    q, k, v = split(q), split(k), split(v)
    w = jnp.einsum("bqd,bkd->bqk", q, k)
    w = jax.nn.softmax(w.astype(jnp.float32), axis=-1).astype(q.dtype)
    attn = jnp.einsum("bqk,bkd->bqd", w, v)
    attn = attn.reshape(B, num_heads, S, D).transpose(0, 2, 1, 3).reshape(B, S, E)
    return lin(attn, params["o_w"], params["o_b"])


if __name__ == "__main__":
    B, S, E, H = 4, 8, 32, 4   # small demo shapes; S multiple of 8, E of 32

    root = jax.random.PRNGKey(0)
    kq, kk, kv, kp = jax.random.split(root, 4)
    query = jax.random.normal(kq, (B, S, E), jnp.float32)
    key = jax.random.normal(kk, (B, S, E), jnp.float32)
    value = jax.random.normal(kv, (B, S, E), jnp.float32)
    params = init_params(kp, E)

    prep = prepare_params(params, num_heads=H)           # one-time weight prep
    out = multihead_attention(query, key, value, prep, num_heads=H)
    out = jax.block_until_ready(out)

    ref = reference_mha(query, key, value, params, num_heads=H)
    assert out.shape == (B, S, E)
    # bf16 matmul operands (f32 accumulation / f32 softmax) -> loosened tolerance
    max_err = float(jnp.max(jnp.abs(out - ref)))
    assert max_err < 5e-2, f"mismatch vs reference: max_err={max_err}"

    print("KERNEL_OK")
</pallas_src>

<mosaic_0001>
module attributes {stable_mosaic.version = 11 : i64} {
  func.func @kernel(%arg0: i32, %arg1: memref<2x8x32xf32, #tpu.memory_space<vmem>>, %arg2: memref<2x8x32xf32, #tpu.memory_space<vmem>>, %arg3: memref<2x8x32xf32, #tpu.memory_space<vmem>>, %arg4: memref<32x32xbf16, #tpu.memory_space<vmem>>, %arg5: memref<1x32xf32, #tpu.memory_space<vmem>>, %arg6: memref<32x32xbf16, #tpu.memory_space<vmem>>, %arg7: memref<1x32xf32, #tpu.memory_space<vmem>>, %arg8: memref<32x32xbf16, #tpu.memory_space<vmem>>, %arg9: memref<1x32xf32, #tpu.memory_space<vmem>>, %arg10: memref<32x32xbf16, #tpu.memory_space<vmem>>, %arg11: memref<1x32xf32, #tpu.memory_space<vmem>>, %arg12: memref<2x8x32xf32, #tpu.memory_space<vmem>>, %arg13: memref<16x32xf32, #tpu.memory_space<vmem>>) attributes {dimension_semantics = [#tpu.dimension_semantics<parallel>], iteration_bounds = array<i64: 2>, scalar_prefetch = 0 : i64, scratch_operands = 1 : i64, tpu.core_type = #tpu.core_type<tc>, window_params = [{transform_indices = @transform_0, window_bounds = array<i64: 2, 8, 32>}, {transform_indices = @transform_1, window_bounds = array<i64: 2, 8, 32>}, {transform_indices = @transform_2, window_bounds = array<i64: 2, 8, 32>}, {pipeline_mode = #tpu.pipeline_mode<synchronous>, transform_indices = @transform_3, window_bounds = array<i64: 32, 32>}, {pipeline_mode = #tpu.pipeline_mode<synchronous>, transform_indices = @transform_4, window_bounds = array<i64: 1, 32>}, {pipeline_mode = #tpu.pipeline_mode<synchronous>, transform_indices = @transform_5, window_bounds = array<i64: 32, 32>}, {pipeline_mode = #tpu.pipeline_mode<synchronous>, transform_indices = @transform_6, window_bounds = array<i64: 1, 32>}, {pipeline_mode = #tpu.pipeline_mode<synchronous>, transform_indices = @transform_7, window_bounds = array<i64: 32, 32>}, {pipeline_mode = #tpu.pipeline_mode<synchronous>, transform_indices = @transform_8, window_bounds = array<i64: 1, 32>}, {pipeline_mode = #tpu.pipeline_mode<synchronous>, transform_indices = @transform_9, window_bounds = array<i64: 32, 32>}, {pipeline_mode = #tpu.pipeline_mode<synchronous>, transform_indices = @transform_10, window_bounds = array<i64: 1, 32>}, {transform_indices = @transform_11, window_bounds = array<i64: 2, 8, 32>}]} {
    %c0 = arith.constant 0 : index
    %c0_0 = arith.constant 0 : index
    %c0_1 = arith.constant 0 : index
    %0 = vector.load %arg1[%c0, %c0_0, %c0_1] : memref<2x8x32xf32, #tpu.memory_space<vmem>>, vector<2x8x32xf32>
    %1 = vector.shape_cast %0 : vector<2x8x32xf32> to vector<16x32xf32>
    %2 = arith.truncf %1 : vector<16x32xf32> to vector<16x32xbf16>
    %c0_2 = arith.constant 0 : index
    %c0_3 = arith.constant 0 : index
    %c0_4 = arith.constant 0 : index
    %3 = vector.load %arg2[%c0_2, %c0_3, %c0_4] : memref<2x8x32xf32, #tpu.memory_space<vmem>>, vector<2x8x32xf32>
    %4 = vector.shape_cast %3 : vector<2x8x32xf32> to vector<16x32xf32>
    %5 = arith.truncf %4 : vector<16x32xf32> to vector<16x32xbf16>
    %c0_5 = arith.constant 0 : index
    %c0_6 = arith.constant 0 : index
    %c0_7 = arith.constant 0 : index
    %6 = vector.load %arg3[%c0_5, %c0_6, %c0_7] : memref<2x8x32xf32, #tpu.memory_space<vmem>>, vector<2x8x32xf32>
    %7 = vector.shape_cast %6 : vector<2x8x32xf32> to vector<16x32xf32>
    %8 = arith.truncf %7 : vector<16x32xf32> to vector<16x32xbf16>
    %c0_8 = arith.constant 0 : index
    %c0_9 = arith.constant 0 : index
    %9 = vector.load %arg4[%c0_8, %c0_9] : memref<32x32xbf16, #tpu.memory_space<vmem>>, vector<32x32xbf16>
    %cst = arith.constant dense<0.000000e+00> : vector<16x32xf32>
    %10 = tpu.matmul %2, %9, %cst {dimension_numbers = #tpu.dot_dimension_numbers<[1], [0], [0], [1], [0, 0, 1, 1], [], []>} : vector<16x32xbf16>, vector<32x32xbf16>, vector<16x32xf32> -> vector<16x32xf32>
    %c0_10 = arith.constant 0 : index
    %c0_11 = arith.constant 0 : index
    %11 = vector.load %arg5[%c0_10, %c0_11] : memref<1x32xf32, #tpu.memory_space<vmem>>, vector<1x32xf32>
    %12 = vector.broadcast %11 : vector<1x32xf32> to vector<16x32xf32>
    %13 = arith.addf %10, %12 : vector<16x32xf32>
    %c0_12 = arith.constant 0 : index
    %c0_13 = arith.constant 0 : index
    %14 = vector.load %arg6[%c0_12, %c0_13] : memref<32x32xbf16, #tpu.memory_space<vmem>>, vector<32x32xbf16>
    %cst_14 = arith.constant dense<0.000000e+00> : vector<16x32xf32>
    %15 = tpu.matmul %5, %14, %cst_14 {dimension_numbers = #tpu.dot_dimension_numbers<[1], [0], [0], [1], [0, 0, 1, 1], [], []>} : vector<16x32xbf16>, vector<32x32xbf16>, vector<16x32xf32> -> vector<16x32xf32>
    %c0_15 = arith.constant 0 : index
    %c0_16 = arith.constant 0 : index
    %16 = vector.load %arg7[%c0_15, %c0_16] : memref<1x32xf32, #tpu.memory_space<vmem>>, vector<1x32xf32>
    %17 = vector.broadcast %16 : vector<1x32xf32> to vector<16x32xf32>
    %18 = arith.addf %15, %17 : vector<16x32xf32>
    %c0_17 = arith.constant 0 : index
    %c0_18 = arith.constant 0 : index
    %19 = vector.load %arg8[%c0_17, %c0_18] : memref<32x32xbf16, #tpu.memory_space<vmem>>, vector<32x32xbf16>
    %cst_19 = arith.constant dense<0.000000e+00> : vector<16x32xf32>
    %20 = tpu.matmul %8, %19, %cst_19 {dimension_numbers = #tpu.dot_dimension_numbers<[1], [0], [0], [1], [0, 0, 1, 1], [], []>} : vector<16x32xbf16>, vector<32x32xbf16>, vector<16x32xf32> -> vector<16x32xf32>
    %c0_20 = arith.constant 0 : index
    %c0_21 = arith.constant 0 : index
    %21 = vector.load %arg9[%c0_20, %c0_21] : memref<1x32xf32, #tpu.memory_space<vmem>>, vector<1x32xf32>
    %22 = vector.broadcast %21 : vector<1x32xf32> to vector<16x32xf32>
    %23 = arith.addf %20, %22 : vector<16x32xf32>
    %24 = vector.shape_cast %13 : vector<16x32xf32> to vector<2x8x32xf32>
    %25 = vector.shape_cast %18 : vector<16x32xf32> to vector<2x8x32xf32>
    %26 = vector.shape_cast %23 : vector<16x32xf32> to vector<2x8x32xf32>
    %27 = vector.extract_strided_slice %24 {offsets = [0, 0, 0], sizes = [2, 8, 8], strides = [1, 1, 1]} : vector<2x8x32xf32> to vector<2x8x8xf32>
    %28 = arith.truncf %27 : vector<2x8x8xf32> to vector<2x8x8xbf16>
    %29 = vector.extract_strided_slice %25 {offsets = [0, 0, 0], sizes = [2, 8, 8], strides = [1, 1, 1]} : vector<2x8x32xf32> to vector<2x8x8xf32>
    %30 = arith.truncf %29 : vector<2x8x8xf32> to vector<2x8x8xbf16>
    %31 = vector.extract_strided_slice %26 {offsets = [0, 0, 0], sizes = [2, 8, 8], strides = [1, 1, 1]} : vector<2x8x32xf32> to vector<2x8x8xf32>
    %32 = arith.truncf %31 : vector<2x8x8xf32> to vector<2x8x8xbf16>
    "tpu.trace_start"() <{level = 10 : i32, message = "bqd,bkd->bqk"}> : () -> ()
    %cst_22 = arith.constant dense<0.000000e+00> : vector<2x8x8xf32>
    %33 = tpu.matmul %28, %30, %cst_22 {dimension_numbers = #tpu.dot_dimension_numbers<[2], [2], [1], [1], [0, 0, 0, 1, 1, 1], [0], [0]>} : vector<2x8x8xbf16>, vector<2x8x8xbf16>, vector<2x8x8xf32> -> vector<2x8x8xf32>
    "tpu.trace_stop"() : () -> ()
    %cst_23 = arith.constant dense<0xFF800000> : vector<2x8xf32>
    %34 = vector.multi_reduction <maximumf>, %33, %cst_23 [2] : vector<2x8x8xf32> to vector<2x8xf32>
    %35 = vector.shape_cast %34 : vector<2x8xf32> to vector<2x8x1xf32>
    %36 = vector.broadcast %35 : vector<2x8x1xf32> to vector<2x8x8xf32>
    %37 = arith.subf %33, %36 : vector<2x8x8xf32>
    %38 = math.exp %37 : vector<2x8x8xf32>
    %cst_24 = arith.constant dense<0.000000e+00> : vector<2x8xf32>
    %39 = vector.multi_reduction <add>, %38, %cst_24 [2] : vector<2x8x8xf32> to vector<2x8xf32>
    %40 = vector.shape_cast %39 : vector<2x8xf32> to vector<2x8x1xf32>
    %41 = tpu.reciprocal %40 {approx = true} : vector<2x8x1xf32> -> vector<2x8x1xf32>
    %42 = vector.broadcast %41 : vector<2x8x1xf32> to vector<2x8x8xf32>
    %43 = arith.mulf %38, %42 : vector<2x8x8xf32>
    %44 = arith.truncf %43 : vector<2x8x8xf32> to vector<2x8x8xbf16>
    "tpu.trace_start"() <{level = 10 : i32, message = "bqk,bkd->bqd"}> : () -> ()
    %cst_25 = arith.constant dense<0.000000e+00> : vector<2x8x8xf32>
    %45 = tpu.matmul %44, %32, %cst_25 {dimension_numbers = #tpu.dot_dimension_numbers<[2], [1], [1], [2], [0, 0, 0, 1, 1, 2], [0], [0]>} : vector<2x8x8xbf16>, vector<2x8x8xbf16>, vector<2x8x8xf32> -> vector<2x8x8xf32>
    "tpu.trace_stop"() : () -> ()
    %46 = vector.shape_cast %45 : vector<2x8x8xf32> to vector<16x8xf32>
    %c0_26 = arith.constant 0 : index
    %c0_27 = arith.constant 0 : index
    %47 = vector.load %arg13[%c0_26, %c0_27] : memref<16x32xf32, #tpu.memory_space<vmem>>, vector<16x8xf32>
    tpu.vector_store %arg13[%c0_26, %c0_27], %46 {strides = array<i32>} : memref<16x32xf32, #tpu.memory_space<vmem>>, vector<16x8xf32>,
    %48 = vector.extract_strided_slice %24 {offsets = [0, 0, 8], sizes = [2, 8, 8], strides = [1, 1, 1]} : vector<2x8x32xf32> to vector<2x8x8xf32>
    %49 = arith.truncf %48 : vector<2x8x8xf32> to vector<2x8x8xbf16>
    %50 = vector.extract_strided_slice %25 {offsets = [0, 0, 8], sizes = [2, 8, 8], strides = [1, 1, 1]} : vector<2x8x32xf32> to vector<2x8x8xf32>
    %51 = arith.truncf %50 : vector<2x8x8xf32> to vector<2x8x8xbf16>
    %52 = vector.extract_strided_slice %26 {offsets = [0, 0, 8], sizes = [2, 8, 8], strides = [1, 1, 1]} : vector<2x8x32xf32> to vector<2x8x8xf32>
    %53 = arith.truncf %52 : vector<2x8x8xf32> to vector<2x8x8xbf16>
    "tpu.trace_start"() <{level = 10 : i32, message = "bqd,bkd->bqk"}> : () -> ()
    %cst_28 = arith.constant dense<0.000000e+00> : vector<2x8x8xf32>
    %54 = tpu.matmul %49, %51, %cst_28 {dimension_numbers = #tpu.dot_dimension_numbers<[2], [2], [1], [1], [0, 0, 0, 1, 1, 1], [0], [0]>} : vector<2x8x8xbf16>, vector<2x8x8xbf16>, vector<2x8x8xf32> -> vector<2x8x8xf32>
    "tpu.trace_stop"() : () -> ()
    %cst_29 = arith.constant dense<0xFF800000> : vector<2x8xf32>
    %55 = vector.multi_reduction <maximumf>, %54, %cst_29 [2] : vector<2x8x8xf32> to vector<2x8xf32>
    %56 = vector.shape_cast %55 : vector<2x8xf32> to vector<2x8x1xf32>
    %57 = vector.broadcast %56 : vector<2x8x1xf32> to vector<2x8x8xf32>
    %58 = arith.subf %54, %57 : vector<2x8x8xf32>
    %59 = math.exp %58 : vector<2x8x8xf32>
    %cst_30 = arith.constant dense<0.000000e+00> : vector<2x8xf32>
    %60 = vector.multi_reduction <add>, %59, %cst_30 [2] : vector<2x8x8xf32> to vector<2x8xf32>
    %61 = vector.shape_cast %60 : vector<2x8xf32> to vector<2x8x1xf32>
    %62 = tpu.reciprocal %61 {approx = true} : vector<2x8x1xf32> -> vector<2x8x1xf32>
    %63 = vector.broadcast %62 : vector<2x8x1xf32> to vector<2x8x8xf32>
    %64 = arith.mulf %59, %63 : vector<2x8x8xf32>
    %65 = arith.truncf %64 : vector<2x8x8xf32> to vector<2x8x8xbf16>
    "tpu.trace_start"() <{level = 10 : i32, message = "bqk,bkd->bqd"}> : () -> ()
    %cst_31 = arith.constant dense<0.000000e+00> : vector<2x8x8xf32>
    %66 = tpu.matmul %65, %53, %cst_31 {dimension_numbers = #tpu.dot_dimension_numbers<[2], [1], [1], [2], [0, 0, 0, 1, 1, 2], [0], [0]>} : vector<2x8x8xbf16>, vector<2x8x8xbf16>, vector<2x8x8xf32> -> vector<2x8x8xf32>
    "tpu.trace_stop"() : () -> ()
    %67 = vector.shape_cast %66 : vector<2x8x8xf32> to vector<16x8xf32>
    %c0_32 = arith.constant 0 : index
    %c8 = arith.constant 8 : index
    %68 = vector.load %arg13[%c0_32, %c8] : memref<16x32xf32, #tpu.memory_space<vmem>>, vector<16x8xf32>
    tpu.vector_store %arg13[%c0_32, %c8], %67 {strides = array<i32>} : memref<16x32xf32, #tpu.memory_space<vmem>>, vector<16x8xf32>,
    %69 = vector.extract_strided_slice %24 {offsets = [0, 0, 16], sizes = [2, 8, 8], strides = [1, 1, 1]} : vector<2x8x32xf32> to vector<2x8x8xf32>
    %70 = arith.truncf %69 : vector<2x8x8xf32> to vector<2x8x8xbf16>
    %71 = vector.extract_strided_slice %25 {offsets = [0, 0, 16], sizes = [2, 8, 8], strides = [1, 1, 1]} : vector<2x8x32xf32> to vector<2x8x8xf32>
    %72 = arith.truncf %71 : vector<2x8x8xf32> to vector<2x8x8xbf16>
    %73 = vector.extract_strided_slice %26 {offsets = [0, 0, 16], sizes = [2, 8, 8], strides = [1, 1, 1]} : vector<2x8x32xf32> to vector<2x8x8xf32>
    %74 = arith.truncf %73 : vector<2x8x8xf32> to vector<2x8x8xbf16>
    "tpu.trace_start"() <{level = 10 : i32, message = "bqd,bkd->bqk"}> : () -> ()
    %cst_33 = arith.constant dense<0.000000e+00> : vector<2x8x8xf32>
    %75 = tpu.matmul %70, %72, %cst_33 {dimension_numbers = #tpu.dot_dimension_numbers<[2], [2], [1], [1], [0, 0, 0, 1, 1, 1], [0], [0]>} : vector<2x8x8xbf16>, vector<2x8x8xbf16>, vector<2x8x8xf32> -> vector<2x8x8xf32>
    "tpu.trace_stop"() : () -> ()
    %cst_34 = arith.constant dense<0xFF800000> : vector<2x8xf32>
    %76 = vector.multi_reduction <maximumf>, %75, %cst_34 [2] : vector<2x8x8xf32> to vector<2x8xf32>
    %77 = vector.shape_cast %76 : vector<2x8xf32> to vector<2x8x1xf32>
    %78 = vector.broadcast %77 : vector<2x8x1xf32> to vector<2x8x8xf32>
    %79 = arith.subf %75, %78 : vector<2x8x8xf32>
    %80 = math.exp %79 : vector<2x8x8xf32>
    %cst_35 = arith.constant dense<0.000000e+00> : vector<2x8xf32>
    %81 = vector.multi_reduction <add>, %80, %cst_35 [2] : vector<2x8x8xf32> to vector<2x8xf32>
    %82 = vector.shape_cast %81 : vector<2x8xf32> to vector<2x8x1xf32>
    %83 = tpu.reciprocal %82 {approx = true} : vector<2x8x1xf32> -> vector<2x8x1xf32>
    %84 = vector.broadcast %83 : vector<2x8x1xf32> to vector<2x8x8xf32>
    %85 = arith.mulf %80, %84 : vector<2x8x8xf32>
    %86 = arith.truncf %85 : vector<2x8x8xf32> to vector<2x8x8xbf16>
    "tpu.trace_start"() <{level = 10 : i32, message = "bqk,bkd->bqd"}> : () -> ()
    %cst_36 = arith.constant dense<0.000000e+00> : vector<2x8x8xf32>
    %87 = tpu.matmul %86, %74, %cst_36 {dimension_numbers = #tpu.dot_dimension_numbers<[2], [1], [1], [2], [0, 0, 0, 1, 1, 2], [0], [0]>} : vector<2x8x8xbf16>, vector<2x8x8xbf16>, vector<2x8x8xf32> -> vector<2x8x8xf32>
    "tpu.trace_stop"() : () -> ()
    %88 = vector.shape_cast %87 : vector<2x8x8xf32> to vector<16x8xf32>
    %c0_37 = arith.constant 0 : index
    %c16 = arith.constant 16 : index
    %89 = vector.load %arg13[%c0_37, %c16] : memref<16x32xf32, #tpu.memory_space<vmem>>, vector<16x8xf32>
    tpu.vector_store %arg13[%c0_37, %c16], %88 {strides = array<i32>} : memref<16x32xf32, #tpu.memory_space<vmem>>, vector<16x8xf32>,
    %90 = vector.extract_strided_slice %24 {offsets = [0, 0, 24], sizes = [2, 8, 8], strides = [1, 1, 1]} : vector<2x8x32xf32> to vector<2x8x8xf32>
    %91 = arith.truncf %90 : vector<2x8x8xf32> to vector<2x8x8xbf16>
    %92 = vector.extract_strided_slice %25 {offsets = [0, 0, 24], sizes = [2, 8, 8], strides = [1, 1, 1]} : vector<2x8x32xf32> to vector<2x8x8xf32>
    %93 = arith.truncf %92 : vector<2x8x8xf32> to vector<2x8x8xbf16>
    %94 = vector.extract_strided_slice %26 {offsets = [0, 0, 24], sizes = [2, 8, 8], strides = [1, 1, 1]} : vector<2x8x32xf32> to vector<2x8x8xf32>
    %95 = arith.truncf %94 : vector<2x8x8xf32> to vector<2x8x8xbf16>
    "tpu.trace_start"() <{level = 10 : i32, message = "bqd,bkd->bqk"}> : () -> ()
    %cst_38 = arith.constant dense<0.000000e+00> : vector<2x8x8xf32>
    %96 = tpu.matmul %91, %93, %cst_38 {dimension_numbers = #tpu.dot_dimension_numbers<[2], [2], [1], [1], [0, 0, 0, 1, 1, 1], [0], [0]>} : vector<2x8x8xbf16>, vector<2x8x8xbf16>, vector<2x8x8xf32> -> vector<2x8x8xf32>
    "tpu.trace_stop"() : () -> ()
    %cst_39 = arith.constant dense<0xFF800000> : vector<2x8xf32>
    %97 = vector.multi_reduction <maximumf>, %96, %cst_39 [2] : vector<2x8x8xf32> to vector<2x8xf32>
    %98 = vector.shape_cast %97 : vector<2x8xf32> to vector<2x8x1xf32>
    %99 = vector.broadcast %98 : vector<2x8x1xf32> to vector<2x8x8xf32>
    %100 = arith.subf %96, %99 : vector<2x8x8xf32>
    %101 = math.exp %100 : vector<2x8x8xf32>
    %cst_40 = arith.constant dense<0.000000e+00> : vector<2x8xf32>
    %102 = vector.multi_reduction <add>, %101, %cst_40 [2] : vector<2x8x8xf32> to vector<2x8xf32>
    %103 = vector.shape_cast %102 : vector<2x8xf32> to vector<2x8x1xf32>
    %104 = tpu.reciprocal %103 {approx = true} : vector<2x8x1xf32> -> vector<2x8x1xf32>
    %105 = vector.broadcast %104 : vector<2x8x1xf32> to vector<2x8x8xf32>
    %106 = arith.mulf %101, %105 : vector<2x8x8xf32>
    %107 = arith.truncf %106 : vector<2x8x8xf32> to vector<2x8x8xbf16>
    "tpu.trace_start"() <{level = 10 : i32, message = "bqk,bkd->bqd"}> : () -> ()
    %cst_41 = arith.constant dense<0.000000e+00> : vector<2x8x8xf32>
    %108 = tpu.matmul %107, %95, %cst_41 {dimension_numbers = #tpu.dot_dimension_numbers<[2], [1], [1], [2], [0, 0, 0, 1, 1, 2], [0], [0]>} : vector<2x8x8xbf16>, vector<2x8x8xbf16>, vector<2x8x8xf32> -> vector<2x8x8xf32>
    "tpu.trace_stop"() : () -> ()
    %109 = vector.shape_cast %108 : vector<2x8x8xf32> to vector<16x8xf32>
    %c0_42 = arith.constant 0 : index
    %c24 = arith.constant 24 : index
    %110 = vector.load %arg13[%c0_42, %c24] : memref<16x32xf32, #tpu.memory_space<vmem>>, vector<16x8xf32>
    tpu.vector_store %arg13[%c0_42, %c24], %109 {strides = array<i32>} : memref<16x32xf32, #tpu.memory_space<vmem>>, vector<16x8xf32>,
    %c0_43 = arith.constant 0 : index
    %c0_44 = arith.constant 0 : index
    %111 = vector.load %arg13[%c0_43, %c0_44] : memref<16x32xf32, #tpu.memory_space<vmem>>, vector<16x32xf32>
    %112 = arith.truncf %111 : vector<16x32xf32> to vector<16x32xbf16>
    %c0_45 = arith.constant 0 : index
    %c0_46 = arith.constant 0 : index
    %113 = vector.load %arg10[%c0_45, %c0_46] : memref<32x32xbf16, #tpu.memory_space<vmem>>, vector<32x32xbf16>
    %cst_47 = arith.constant dense<0.000000e+00> : vector<16x32xf32>
    %114 = tpu.matmul %112, %113, %cst_47 {dimension_numbers = #tpu.dot_dimension_numbers<[1], [0], [0], [1], [0, 0, 1, 1], [], []>} : vector<16x32xbf16>, vector<32x32xbf16>, vector<16x32xf32> -> vector<16x32xf32>
    %c0_48 = arith.constant 0 : index
    %c0_49 = arith.constant 0 : index
    %115 = vector.load %arg11[%c0_48, %c0_49] : memref<1x32xf32, #tpu.memory_space<vmem>>, vector<1x32xf32>
    %116 = vector.broadcast %115 : vector<1x32xf32> to vector<16x32xf32>
    %117 = arith.addf %114, %116 : vector<16x32xf32>
    %118 = vector.shape_cast %117 : vector<16x32xf32> to vector<2x8x32xf32>
    %c0_50 = arith.constant 0 : index
    %c0_51 = arith.constant 0 : index
    %c0_52 = arith.constant 0 : index
    %119 = vector.load %arg12[%c0_50, %c0_51, %c0_52] : memref<2x8x32xf32, #tpu.memory_space<vmem>>, vector<2x8x32xf32>
    tpu.vector_store %arg12[%c0_50, %c0_51, %c0_52], %118 {strides = array<i32>} : memref<2x8x32xf32, #tpu.memory_space<vmem>>, vector<2x8x32xf32>,
    return
  }
  func.func @transform_0(%arg0: i32) -> (i32, i32, i32) {
    %c0_i32 = arith.constant 0 : i32
    %c0_i32_0 = arith.constant 0 : i32
    %c0_i32_1 = arith.constant 0 : i32
    return %arg0, %c0_i32, %c0_i32_0 : i32, i32, i32
  }
  func.func @transform_1(%arg0: i32) -> (i32, i32, i32) {
    %c0_i32 = arith.constant 0 : i32
    %c0_i32_0 = arith.constant 0 : i32
    %c0_i32_1 = arith.constant 0 : i32
    return %arg0, %c0_i32, %c0_i32_0 : i32, i32, i32
  }
  func.func @transform_2(%arg0: i32) -> (i32, i32, i32) {
    %c0_i32 = arith.constant 0 : i32
    %c0_i32_0 = arith.constant 0 : i32
    %c0_i32_1 = arith.constant 0 : i32
    return %arg0, %c0_i32, %c0_i32_0 : i32, i32, i32
  }
  func.func @transform_3(%arg0: i32) -> (i32, i32) {
    %c0_i32 = arith.constant 0 : i32
    %c0_i32_0 = arith.constant 0 : i32
    %c0_i32_1 = arith.constant 0 : i32
    return %c0_i32, %c0_i32_0 : i32, i32
  }
  func.func @transform_4(%arg0: i32) -> (i32, i32) {
    %c0_i32 = arith.constant 0 : i32
    %c0_i32_0 = arith.constant 0 : i32
    %c0_i32_1 = arith.constant 0 : i32
    return %c0_i32, %c0_i32_0 : i32, i32
  }
  func.func @transform_5(%arg0: i32) -> (i32, i32) {
    %c0_i32 = arith.constant 0 : i32
    %c0_i32_0 = arith.constant 0 : i32
    %c0_i32_1 = arith.constant 0 : i32
    return %c0_i32, %c0_i32_0 : i32, i32
  }
  func.func @transform_6(%arg0: i32) -> (i32, i32) {
    %c0_i32 = arith.constant 0 : i32
    %c0_i32_0 = arith.constant 0 : i32
    %c0_i32_1 = arith.constant 0 : i32
    return %c0_i32, %c0_i32_0 : i32, i32
  }
  func.func @transform_7(%arg0: i32) -> (i32, i32) {
    %c0_i32 = arith.constant 0 : i32
    %c0_i32_0 = arith.constant 0 : i32
    %c0_i32_1 = arith.constant 0 : i32
    return %c0_i32, %c0_i32_0 : i32, i32
  }
  func.func @transform_8(%arg0: i32) -> (i32, i32) {
    %c0_i32 = arith.constant 0 : i32
    %c0_i32_0 = arith.constant 0 : i32
    %c0_i32_1 = arith.constant 0 : i32
    return %c0_i32, %c0_i32_0 : i32, i32
  }
  func.func @transform_9(%arg0: i32) -> (i32, i32) {
    %c0_i32 = arith.constant 0 : i32
    %c0_i32_0 = arith.constant 0 : i32
    %c0_i32_1 = arith.constant 0 : i32
    return %c0_i32, %c0_i32_0 : i32, i32
  }
  func.func @transform_10(%arg0: i32) -> (i32, i32) {
    %c0_i32 = arith.constant 0 : i32
    %c0_i32_0 = arith.constant 0 : i32
    %c0_i32_1 = arith.constant 0 : i32
    return %c0_i32, %c0_i32_0 : i32, i32
  }
  func.func @transform_11(%arg0: i32) -> (i32, i32, i32) {
    %c0_i32 = arith.constant 0 : i32
    %c0_i32_0 = arith.constant 0 : i32
    %c0_i32_1 = arith.constant 0 : i32
    return %arg0, %c0_i32, %c0_i32_0 : i32, i32, i32
  }
}

</mosaic_0001>

<llo_original>
// kernel: tpu_custom_call.1
$region0: #{tpu_custom_call.1}
  #allocation0 [shape = 'u32[]', space=smem, size = 0x4, offset = 0x4, fixed_abs, tag = 'smem constant byte address 0x4 - core index']
  #allocation1 [shape = 'u32[72,128]{1,0:T(1,128)}', space=vmem, size = 0x9000, scoped, tag = 'internal scratch']
  #allocation2 [shape = 'f32[16,32]{1,0:T(8,128)}', space=vmem, size = 0x2000, scoped, tag = 'scratch operand']
  %s0 = inlined_call_operand.hbm [shape: f32[4,8,32], index: 0, kind: input, shape index: {}]
  %s1 = inlined_call_operand.hbm [shape: f32[4,8,32], index: 1, kind: input, shape index: {}]
  %s2 = inlined_call_operand.hbm [shape: f32[4,8,32], index: 2, kind: input, shape index: {}]
  %s3 = inlined_call_operand.hbm [shape: bf16[32,32], index: 3, kind: input, shape index: {}]
  %s4 = inlined_call_operand.vmem [shape: f32[1,32], index: 4, kind: input, shape index: {}]
  %s5 = inlined_call_operand.hbm [shape: bf16[32,32], index: 5, kind: input, shape index: {}]
  %s6 = inlined_call_operand.vmem [shape: f32[1,32], index: 6, kind: input, shape index: {}]
  %s7 = inlined_call_operand.hbm [shape: bf16[32,32], index: 7, kind: input, shape index: {}]
  %s8 = inlined_call_operand.vmem [shape: f32[1,32], index: 8, kind: input, shape index: {}]
  %s9 = inlined_call_operand.hbm [shape: bf16[32,32], index: 9, kind: input, shape index: {}]
  %s10 = inlined_call_operand.vmem [shape: f32[1,32], index: 10, kind: input, shape index: {}]
  %s11 = inlined_call_operand.hbm [shape: f32[4,8,32], index: 11, kind: output, shape index: {}]
  %s12 = sld [smem:[#allocation0]]
  $region105: #{tpu_custom_call.1} parent=0
    _
  %s14 = ssub.s32 1, %s12
  %s15 = scalar_select 0, %s14, %s12
  $region1: #{tpu_custom_call.1} parent=0
    #allocation3 [shape = 'u8[16384]{0}', space=vmem, size = 0x4000, scoped, tag = 'input window, operand 0']
    #allocation4 [shape = 's32[2]{0}', space=sflag, size = 0x8, scoped, tag = 'scoped memory for tpu_custom_call.1']
    #allocation5 [shape = 's32[2]{0}', space=sflag, size = 0x8, scoped, tag = 'scoped memory for tpu_custom_call.1']
    #allocation6 [shape = 'u8[16384]{0}', space=vmem, size = 0x4000, scoped, tag = 'input window, operand 1']
    #allocation7 [shape = 's32[2]{0}', space=sflag, size = 0x8, scoped, tag = 'scoped memory for tpu_custom_call.1']
    #allocation8 [shape = 'u8[16384]{0}', space=vmem, size = 0x4000, scoped, tag = 'input window, operand 2']
    #allocation9 [shape = 'u8[8192]{0}', space=vmem, size = 0x2000, scoped, tag = 'input window, operand 3, single buffered']
    #allocation10 [shape = 's32[1]{0}', space=sflag, size = 0x4, scoped, tag = 'scoped memory for tpu_custom_call.1']
    #allocation11 [shape = 'u8[8192]{0}', space=vmem, size = 0x2000, scoped, tag = 'input window, operand 5, single buffered']
    #allocation12 [shape = 'u8[8192]{0}', space=vmem, size = 0x2000, scoped, tag = 'input window, operand 7, single buffered']
    #allocation13 [shape = 's32[1]{0}', space=sflag, size = 0x4, scoped, tag = 'scoped memory for tpu_custom_call.1']
    #allocation14 [shape = 'u8[8192]{0}', space=vmem, size = 0x2000, scoped, tag = 'input window, operand 9, single buffered']
    #allocation15 [shape = 'u8[16384]{0}', space=vmem, size = 0x4000, scoped, tag = 'output window, operand 0']
    %16 = vsyncpa [#allocation4], 0
    %s17 = scalar_lea.sflag [#allocation4], 1
    %18 = vsyncpa %s17, 0
    %19 = vsyncpa [#allocation7], 0
    %s20 = scalar_lea.sflag [#allocation7], 1
    %21 = vsyncpa %s20, 0
    %22 = vsyncpa [#allocation10], 0
    %23 = vsyncpa [#allocation13], 0
    %24 = vsyncpa [#allocation5], 0
    %s25 = scalar_lea.sflag [#allocation5], 1
    %26 = vsyncpa %s25, 0
    loop: start=0, step=1, limit=4
    $region2: #{tpu_custom_call.1} parent=1 // loop_pre_header
      _
    $region3: #{tpu_custom_call.1} parent=1 // loop_header
      %s28 = sphi 0, %s32
      %p29 = scmp.ge.s32.totalorder %s28, 4
      %s38 = sphi 0, %s40
      %s41 = sphi 0, %s38
      %s42 = sphi 0, %s41
      %s58 = sphi 0, %s42
      %s64 = sphi 0, %s66
      %s67 = sphi 0, %s64
      %s68 = sphi 0, %s67
      %s84 = sphi 0, %s68
      %s90 = sphi 0, %s92
      %s93 = sphi 0, %s90
      %s94 = sphi 0, %s93
      %s110 = sphi 0, %s94
      %s114 = sphi 0, %s114
      %s116 = sphi 0, %s114
      %s117 = sphi 0, %s116
      %s131 = sphi 0, %s117
      %s135 = sphi 0, %s135
      %s137 = sphi 0, %s135
      %s138 = sphi 0, %s137
      %s152 = sphi 0, %s138
      %s156 = sphi 0, %s156
      %s158 = sphi 0, %s156
      %s159 = sphi 0, %s158
      %s173 = sphi 0, %s159
      %s177 = sphi 0, %s177
      %s179 = sphi 0, %s177
      %s180 = sphi 0, %s179
      %s194 = sphi 0, %s180
      %s198 = sphi 0, %s198
      %s200 = sphi 0, %s198
      %s201 = sphi 0, %s200
      %s215 = sphi 0, %s201
      %s219 = sphi 0, %s219
      %s221 = sphi 0, %s219
      %s222 = sphi 0, %s221
      %s236 = sphi 0, %s222
      %s240 = sphi 0, %s240
      %s242 = sphi 0, %s240
      %s243 = sphi 0, %s242
      %s257 = sphi 0, %s243
      %s261 = sphi 0, %s261
      %s263 = sphi 0, %s261
      %s264 = sphi 0, %s263
      %s278 = sphi 0, %s264
      %s284 = sphi 0, %s286
      %s287 = sphi 0, %s284
      %s288 = sphi 0, %s287
      %s304 = sphi 0, %s288
    $region4: #{tpu_custom_call.1} parent=1 // loop_header_branch
      %31 = sbr.rel (%p29) target = $region8
    $region5: #{tpu_custom_call.1} parent=1 // loop_body
      %s33 = ssub.s32 %s28, 1
      %s34 = ssub.s32 %s28, 2
      %s35 = sadd.s32 %s28, 1
      %s36 = ssub.s32 %s28, %s35
      %p37 = scmp.eq.s32.totalorder %s36, 0
      %s39 = sadd.s32 %s38, 1
      %s40 = scalar_select %p37, %s38, %s39
      %p43 = pneg %p37
      %p44 = scmp.eq.s32.totalorder %s28, 1
      %p45 = por %p43, %p44
      %p46 = scmp.ne.s32.totalorder %s38, %s41
      %p47 = scmp.eq.s32.totalorder %s28, 0
      %p48 = por %p46, %p47
      %p49 = scmp.ne.s32.totalorder %s38, %s41
      %p50 = scmp.eq.s32.totalorder %s33, 1
      %p51 = por %p49, %p50
      %p52 = scmp.ne.s32.totalorder %s41, %s42
      %p53 = scmp.eq.s32.totalorder %s33, 0
      %p54 = por %p52, %p53
      %p55 = scmp.ne.s32.totalorder %s41, %s42
      %p56 = scmp.eq.s32.totalorder %s34, 1
      %p57 = por %p55, %p56
      %p59 = scmp.ne.s32.totalorder %s42, %s58
      %p60 = scmp.eq.s32.totalorder %s34, 0
      %p61 = por %p59, %p60
      %s62 = ssub.s32 %s28, %s35
      %p63 = scmp.eq.s32.totalorder %s62, 0
      %s65 = sadd.s32 %s64, 1
      %s66 = scalar_select %p63, %s64, %s65
      %p69 = pneg %p63
      %p70 = scmp.eq.s32.totalorder %s28, 1
      %p71 = por %p69, %p70
      %p72 = scmp.ne.s32.totalorder %s64, %s67
      %p73 = scmp.eq.s32.totalorder %s28, 0
      %p74 = por %p72, %p73
      %p75 = scmp.ne.s32.totalorder %s64, %s67
      %p76 = scmp.eq.s32.totalorder %s33, 1
      %p77 = por %p75, %p76
      %p78 = scmp.ne.s32.totalorder %s67, %s68
      %p79 = scmp.eq.s32.totalorder %s33, 0
      %p80 = por %p78, %p79
      %p81 = scmp.ne.s32.totalorder %s67, %s68
      %p82 = scmp.eq.s32.totalorder %s34, 1
      %p83 = por %p81, %p82
      %p85 = scmp.ne.s32.totalorder %s68, %s84
      %p86 = scmp.eq.s32.totalorder %s34, 0
      %p87 = por %p85, %p86
      %s88 = ssub.s32 %s28, %s35
      %p89 = scmp.eq.s32.totalorder %s88, 0
      %s91 = sadd.s32 %s90, 1
      %s92 = scalar_select %p89, %s90, %s91
      %p95 = pneg %p89
      %p96 = scmp.eq.s32.totalorder %s28, 1
      %p97 = por %p95, %p96
      %p98 = scmp.ne.s32.totalorder %s90, %s93
      %p99 = scmp.eq.s32.totalorder %s28, 0
      %p100 = por %p98, %p99
      %p101 = scmp.ne.s32.totalorder %s90, %s93
      %p102 = scmp.eq.s32.totalorder %s33, 1
      %p103 = por %p101, %p102
      %p104 = scmp.ne.s32.totalorder %s93, %s94
      %p105 = scmp.eq.s32.totalorder %s33, 0
      %p106 = por %p104, %p105
      %p107 = scmp.ne.s32.totalorder %s93, %s94
      %p108 = scmp.eq.s32.totalorder %s34, 1
      %p109 = por %p107, %p108
      %p111 = scmp.ne.s32.totalorder %s94, %s110
      %p112 = scmp.eq.s32.totalorder %s34, 0
      %p113 = por %p111, %p112
      %s115 = sadd.s32 %s114, 1
      %p118 = scmp.eq.s32.totalorder %s28, 1
      %p119 = scmp.ne.s32.totalorder %s114, %s116
      %p120 = scmp.eq.s32.totalorder %s28, 0
      %p121 = por %p119, %p120
      %p122 = scmp.ne.s32.totalorder %s114, %s116
      %p123 = scmp.eq.s32.totalorder %s33, 1
      %p124 = por %p122, %p123
      %p125 = scmp.ne.s32.totalorder %s116, %s117
      %p126 = scmp.eq.s32.totalorder %s33, 0
      %p127 = por %p125, %p126
      %p128 = scmp.ne.s32.totalorder %s116, %s117
      %p129 = scmp.eq.s32.totalorder %s34, 1
      %p130 = por %p128, %p129
      %p132 = scmp.ne.s32.totalorder %s117, %s131
      %p133 = scmp.eq.s32.totalorder %s34, 0
      %p134 = por %p132, %p133
      %s136 = sadd.s32 %s135, 1
      %p139 = scmp.eq.s32.totalorder %s28, 1
      %p140 = scmp.ne.s32.totalorder %s135, %s137
      %p141 = scmp.eq.s32.totalorder %s28, 0
      %p142 = por %p140, %p141
      %p143 = scmp.ne.s32.totalorder %s135, %s137
      %p144 = scmp.eq.s32.totalorder %s33, 1
      %p145 = por %p143, %p144
      %p146 = scmp.ne.s32.totalorder %s137, %s138
      %p147 = scmp.eq.s32.totalorder %s33, 0
      %p148 = por %p146, %p147
      %p149 = scmp.ne.s32.totalorder %s137, %s138
      %p150 = scmp.eq.s32.totalorder %s34, 1
      %p151 = por %p149, %p150
      %p153 = scmp.ne.s32.totalorder %s138, %s152
      %p154 = scmp.eq.s32.totalorder %s34, 0
      %p155 = por %p153, %p154
      %s157 = sadd.s32 %s156, 1
      %p160 = scmp.eq.s32.totalorder %s28, 1
      %p161 = scmp.ne.s32.totalorder %s156, %s158
      %p162 = scmp.eq.s32.totalorder %s28, 0
      %p163 = por %p161, %p162
      %p164 = scmp.ne.s32.totalorder %s156, %s158
      %p165 = scmp.eq.s32.totalorder %s33, 1
      %p166 = por %p164, %p165
      %p167 = scmp.ne.s32.totalorder %s158, %s159
      %p168 = scmp.eq.s32.totalorder %s33, 0
      %p169 = por %p167, %p168
      %p170 = scmp.ne.s32.totalorder %s158, %s159
      %p171 = scmp.eq.s32.totalorder %s34, 1
      %p172 = por %p170, %p171
      %p174 = scmp.ne.s32.totalorder %s159, %s173
      %p175 = scmp.eq.s32.totalorder %s34, 0
      %p176 = por %p174, %p175
      %s178 = sadd.s32 %s177, 1
      %p181 = scmp.eq.s32.totalorder %s28, 1
      %p182 = scmp.ne.s32.totalorder %s177, %s179
      %p183 = scmp.eq.s32.totalorder %s28, 0
      %p184 = por %p182, %p183
      %p185 = scmp.ne.s32.totalorder %s177, %s179
      %p186 = scmp.eq.s32.totalorder %s33, 1
      %p187 = por %p185, %p186
      %p188 = scmp.ne.s32.totalorder %s179, %s180
      %p189 = scmp.eq.s32.totalorder %s33, 0
      %p190 = por %p188, %p189
      %p191 = scmp.ne.s32.totalorder %s179, %s180
      %p192 = scmp.eq.s32.totalorder %s34, 1
      %p193 = por %p191, %p192
      %p195 = scmp.ne.s32.totalorder %s180, %s194
      %p196 = scmp.eq.s32.totalorder %s34, 0
      %p197 = por %p195, %p196
      %s199 = sadd.s32 %s198, 1
      %p202 = scmp.eq.s32.totalorder %s28, 1
      %p203 = scmp.ne.s32.totalorder %s198, %s200
      %p204 = scmp.eq.s32.totalorder %s28, 0
      %p205 = por %p203, %p204
      %p206 = scmp.ne.s32.totalorder %s198, %s200
      %p207 = scmp.eq.s32.totalorder %s33, 1
      %p208 = por %p206, %p207
      %p209 = scmp.ne.s32.totalorder %s200, %s201
      %p210 = scmp.eq.s32.totalorder %s33, 0
      %p211 = por %p209, %p210
      %p212 = scmp.ne.s32.totalorder %s200, %s201
      %p213 = scmp.eq.s32.totalorder %s34, 1
      %p214 = por %p212, %p213
      %p216 = scmp.ne.s32.totalorder %s201, %s215
      %p217 = scmp.eq.s32.totalorder %s34, 0
      %p218 = por %p216, %p217
      %s220 = sadd.s32 %s219, 1
      %p223 = scmp.eq.s32.totalorder %s28, 1
      %p224 = scmp.ne.s32.totalorder %s219, %s221
      %p225 = scmp.eq.s32.totalorder %s28, 0
      %p226 = por %p224, %p225
      %p227 = scmp.ne.s32.totalorder %s219, %s221
      %p228 = scmp.eq.s32.totalorder %s33, 1
      %p229 = por %p227, %p228
      %p230 = scmp.ne.s32.totalorder %s221, %s222
      %p231 = scmp.eq.s32.totalorder %s33, 0
      %p232 = por %p230, %p231
      %p233 = scmp.ne.s32.totalorder %s221, %s222
      %p234 = scmp.eq.s32.totalorder %s34, 1
      %p235 = por %p233, %p234
      %p237 = scmp.ne.s32.totalorder %s222, %s236
      %p238 = scmp.eq.s32.totalorder %s34, 0
      %p239 = por %p237, %p238
      %s241 = sadd.s32 %s240, 1
      %p244 = scmp.eq.s32.totalorder %s28, 1
      %p245 = scmp.ne.s32.totalorder %s240, %s242
      %p246 = scmp.eq.s32.totalorder %s28, 0
      %p247 = por %p245, %p246
      %p248 = scmp.ne.s32.totalorder %s240, %s242
      %p249 = scmp.eq.s32.totalorder %s33, 1
      %p250 = por %p248, %p249
      %p251 = scmp.ne.s32.totalorder %s242, %s243
      %p252 = scmp.eq.s32.totalorder %s33, 0
      %p253 = por %p251, %p252
      %p254 = scmp.ne.s32.totalorder %s242, %s243
      %p255 = scmp.eq.s32.totalorder %s34, 1
      %p256 = por %p254, %p255
      %p258 = scmp.ne.s32.totalorder %s243, %s257
      %p259 = scmp.eq.s32.totalorder %s34, 0
      %p260 = por %p258, %p259
      %s262 = sadd.s32 %s261, 1
      %p265 = scmp.eq.s32.totalorder %s28, 1
      %p266 = scmp.ne.s32.totalorder %s261, %s263
      %p267 = scmp.eq.s32.totalorder %s28, 0
      %p268 = por %p266, %p267
      %p269 = scmp.ne.s32.totalorder %s261, %s263
      %p270 = scmp.eq.s32.totalorder %s33, 1
      %p271 = por %p269, %p270
      %p272 = scmp.ne.s32.totalorder %s263, %s264
      %p273 = scmp.eq.s32.totalorder %s33, 0
      %p274 = por %p272, %p273
      %p275 = scmp.ne.s32.totalorder %s263, %s264
      %p276 = scmp.eq.s32.totalorder %s34, 1
      %p277 = por %p275, %p276
      %p279 = scmp.ne.s32.totalorder %s264, %s278
      %p280 = scmp.eq.s32.totalorder %s34, 0
      %p281 = por %p279, %p280
      %s282 = ssub.s32 %s28, %s35
      %p283 = scmp.eq.s32.totalorder %s282, 0
      %s285 = sadd.s32 %s284, 1
      %s286 = scalar_select %p283, %s284, %s285
      %p289 = pneg %p283
      %p290 = scmp.eq.s32.totalorder %s28, 1
      %p291 = por %p289, %p290
      %p292 = scmp.ne.s32.totalorder %s284, %s287
      %p293 = scmp.eq.s32.totalorder %s28, 0
      %p294 = por %p292, %p293
      %p295 = scmp.ne.s32.totalorder %s284, %s287
      %p296 = scmp.eq.s32.totalorder %s33, 1
      %p297 = por %p295, %p296
      %p298 = scmp.ne.s32.totalorder %s287, %s288
      %p299 = scmp.eq.s32.totalorder %s33, 0
      %p300 = por %p298, %p299
      %p301 = scmp.ne.s32.totalorder %s287, %s288
      %p302 = scmp.eq.s32.totalorder %s34, 1
      %p303 = por %p301, %p302
      %p305 = scmp.ne.s32.totalorder %s288, %s304
      %p306 = scmp.eq.s32.totalorder %s34, 0
      %p307 = por %p305, %p306
      %p308 = scmp.le.s32.totalorder 1, %s28
      %p309 = scmp.lt.s32.totalorder %s28, 3
      %p310 = pnand %p308, %p309
      %p311 = pneg %p310
      // Predicated region
      $region9: #{tpu_custom_call.1} parent=5 // pred_check
        _
      $region10: #{tpu_custom_call.1} parent=5 // pred_check_branch
        %313 = sbr.rel (%p310) target = $region12
      $region11: #{tpu_custom_call.1} parent=5 // pred_region
        %s314 = ssub.s32 %s28, 1
        // Predicated region
        $region13: #{tpu_custom_call.1} parent=11 // pred_check
          %p315 = pneg %p127
        $region14: #{tpu_custom_call.1} parent=11 // pred_check_branch
          %317 = sbr.rel (%p315) target = $region16
        $region15: #{tpu_custom_call.1} parent=11 // pred_region
          %319 = vsyncadd [#allocation10], 0
          %s320 = sshll.u32 %s3, 4
          %s321 = int_to_ptr.hbm [resolvable:$true] %s320
          %s322 = sshll.u32 [#allocation9], 4
          %s323 = int_to_ptr.vmem [resolvable:$true] %s322
          %328 = dma.hbm_to_vmem [thread:$0]  %s321, 256, %s323, [#allocation10], 64, 64, 4
        $region16: #{tpu_custom_call.1} parent=11 // pred_fallthru
          _
        // Predicated region
        $region17: #{tpu_custom_call.1} parent=11 // pred_check
          %p329 = pneg %p148
        $region18: #{tpu_custom_call.1} parent=11 // pred_check_branch
          %331 = sbr.rel (%p329) target = $region20
        $region19: #{tpu_custom_call.1} parent=11 // pred_region
          _
        $region20: #{tpu_custom_call.1} parent=11 // pred_fallthru
          _
        // Predicated region
        $region21: #{tpu_custom_call.1} parent=11 // pred_check
          %p332 = pneg %p169
        $region22: #{tpu_custom_call.1} parent=11 // pred_check_branch
          %334 = sbr.rel (%p332) target = $region24
        $region23: #{tpu_custom_call.1} parent=11 // pred_region
          %336 = vsyncadd [#allocation10], 0
          %s337 = sshll.u32 %s5, 4
          %s338 = int_to_ptr.hbm [resolvable:$true] %s337
          %s339 = sshll.u32 [#allocation11], 4
          %s340 = int_to_ptr.vmem [resolvable:$true] %s339
          %345 = dma.hbm_to_vmem [thread:$0]  %s338, 256, %s340, [#allocation10], 64, 64, 4
        $region24: #{tpu_custom_call.1} parent=11 // pred_fallthru
          _
        // Predicated region
        $region25: #{tpu_custom_call.1} parent=11 // pred_check
          %p346 = pneg %p190
        $region26: #{tpu_custom_call.1} parent=11 // pred_check_branch
          %348 = sbr.rel (%p346) target = $region28
        $region27: #{tpu_custom_call.1} parent=11 // pred_region
          _
        $region28: #{tpu_custom_call.1} parent=11 // pred_fallthru
          _
        // Predicated region
        $region29: #{tpu_custom_call.1} parent=11 // pred_check
          %p349 = pneg %p211
        $region30: #{tpu_custom_call.1} parent=11 // pred_check_branch
          %351 = sbr.rel (%p349) target = $region32
        $region31: #{tpu_custom_call.1} parent=11 // pred_region
          %353 = vsyncadd [#allocation13], 0
          %s354 = sshll.u32 %s7, 4
          %s355 = int_to_ptr.hbm [resolvable:$true] %s354
          %s356 = sshll.u32 [#allocation12], 4
          %s357 = int_to_ptr.vmem [resolvable:$true] %s356
          %362 = dma.hbm_to_vmem [thread:$0]  %s355, 256, %s357, [#allocation13], 64, 64, 4
        $region32: #{tpu_custom_call.1} parent=11 // pred_fallthru
          _
        // Predicated region
        $region33: #{tpu_custom_call.1} parent=11 // pred_check
          %p363 = pneg %p232
        $region34: #{tpu_custom_call.1} parent=11 // pred_check_branch
          %365 = sbr.rel (%p363) target = $region36
        $region35: #{tpu_custom_call.1} parent=11 // pred_region
          _
        $region36: #{tpu_custom_call.1} parent=11 // pred_fallthru
          _
        // Predicated region
        $region37: #{tpu_custom_call.1} parent=11 // pred_check
          %p366 = pneg %p253
        $region38: #{tpu_custom_call.1} parent=11 // pred_check_branch
          %368 = sbr.rel (%p366) target = $region40
        $region39: #{tpu_custom_call.1} parent=11 // pred_region
          %370 = vsyncadd [#allocation13], 0
          %s371 = sshll.u32 %s9, 4
          %s372 = int_to_ptr.hbm [resolvable:$true] %s371
          %s373 = sshll.u32 [#allocation14], 4
          %s374 = int_to_ptr.vmem [resolvable:$true] %s373
          %379 = dma.hbm_to_vmem [thread:$0]  %s372, 256, %s374, [#allocation13], 64, 64, 4
        $region40: #{tpu_custom_call.1} parent=11 // pred_fallthru
          _
        // Predicated region
        $region41: #{tpu_custom_call.1} parent=11 // pred_check
          %p380 = pneg %p274
        $region42: #{tpu_custom_call.1} parent=11 // pred_check_branch
          %382 = sbr.rel (%p380) target = $region44
        $region43: #{tpu_custom_call.1} parent=11 // pred_region
          _
        $region44: #{tpu_custom_call.1} parent=11 // pred_fallthru
          _
      $region12: #{tpu_custom_call.1} parent=5 // pred_fallthru
        _
      %p383 = scmp.lt.s32.totalorder %s28, 2
      // Predicated region
      $region45: #{tpu_custom_call.1} parent=5 // pred_check
        %p384 = pneg %p383
      $region46: #{tpu_custom_call.1} parent=5 // pred_check_branch
        %386 = sbr.rel (%p384) target = $region48
      $region47: #{tpu_custom_call.1} parent=5 // pred_region
        // Predicated region
        $region49: #{tpu_custom_call.1} parent=47 // pred_check
          %p387 = pneg %p48
        $region50: #{tpu_custom_call.1} parent=47 // pred_check_branch
          %389 = sbr.rel (%p387) target = $region52
        $region51: #{tpu_custom_call.1} parent=47 // pred_region
          %s390 = sand.u32 %s38, 1
          %s391 = scalar_lea.sflag [#allocation4], %s390
          %s392 = sand.u32 %s38, 1
          %s393 = smul.addr %s392, 16
          %s394 = scalar_lea.vmem [#allocation3], %s393
          %s395 = smul.u32 2, %s28
          %397 = vsyncadd %s391, 0
          %s398 = smul.addr %s395, 8
          %s399 = scalar_lea.hbm %s0, %s398
          %s400 = sshll.u32 %s399, 4
          %s401 = int_to_ptr.hbm [resolvable:$true] %s400
          %s402 = sshll.u32 %s394, 4
          %s403 = int_to_ptr.vmem [resolvable:$true] %s402
          %408 = dma.hbm_to_vmem [thread:$0]  %s401, 256, %s403, %s391, 128, 128, 8
        $region52: #{tpu_custom_call.1} parent=47 // pred_fallthru
          _
        // Predicated region
        $region53: #{tpu_custom_call.1} parent=47 // pred_check
          %p409 = pneg %p74
        $region54: #{tpu_custom_call.1} parent=47 // pred_check_branch
          %411 = sbr.rel (%p409) target = $region56
        $region55: #{tpu_custom_call.1} parent=47 // pred_region
          %s412 = sand.u32 %s28, 1
          %s413 = scalar_lea.sflag [#allocation7], %s412
          %s414 = sand.u32 %s64, 1
          %s415 = smul.addr %s414, 16
          %s416 = scalar_lea.vmem [#allocation6], %s415
          %s417 = smul.u32 2, %s28
          %419 = vsyncadd %s413, 0
          %s420 = smul.addr %s417, 8
          %s421 = scalar_lea.hbm %s1, %s420
          %s422 = sshll.u32 %s421, 4
          %s423 = int_to_ptr.hbm [resolvable:$true] %s422
          %s424 = sshll.u32 %s416, 4
          %s425 = int_to_ptr.vmem [resolvable:$true] %s424
          %430 = dma.hbm_to_vmem [thread:$0]  %s423, 256, %s425, %s413, 128, 128, 8
        $region56: #{tpu_custom_call.1} parent=47 // pred_fallthru
          _
        // Predicated region
        $region57: #{tpu_custom_call.1} parent=47 // pred_check
          %p431 = pneg %p100
        $region58: #{tpu_custom_call.1} parent=47 // pred_check_branch
          %433 = sbr.rel (%p431) target = $region60
        $region59: #{tpu_custom_call.1} parent=47 // pred_region
          %s434 = sand.u32 %s28, 1
          %s435 = scalar_lea.sflag [#allocation7], %s434
          %s436 = sand.u32 %s90, 1
          %s437 = smul.addr %s436, 16
          %s438 = scalar_lea.vmem [#allocation8], %s437
          %s439 = smul.u32 2, %s28
          %441 = vsyncadd %s435, 0
          %s442 = smul.addr %s439, 8
          %s443 = scalar_lea.hbm %s2, %s442
          %s444 = sshll.u32 %s443, 4
          %s445 = int_to_ptr.hbm [resolvable:$true] %s444
          %s446 = sshll.u32 %s438, 4
          %s447 = int_to_ptr.vmem [resolvable:$true] %s446
          %452 = dma.hbm_to_vmem [thread:$0]  %s445, 256, %s447, %s435, 128, 128, 8
        $region60: #{tpu_custom_call.1} parent=47 // pred_fallthru
          _
      $region48: #{tpu_custom_call.1} parent=5 // pred_fallthru
        _
      %p453 = scmp.le.s32.totalorder 1, %s28
      %p454 = scmp.lt.s32.totalorder %s28, 3
      %p455 = pnand %p453, %p454
      %p456 = pneg %p455
      // Predicated region
      $region61: #{tpu_custom_call.1} parent=5 // pred_check
        _
      $region62: #{tpu_custom_call.1} parent=5 // pred_check_branch
        %458 = sbr.rel (%p455) target = $region64
      $region63: #{tpu_custom_call.1} parent=5 // pred_region
        %s459 = ssub.s32 %s28, 1
        %s460 = sand.u32 %s41, 1
        %s461 = scalar_lea.sflag [#allocation4], %s460
        %s462 = sand.u32 %s41, 1
        %s463 = smul.addr %s462, 16
        %s464 = scalar_lea.vmem [#allocation3], %s463
        // Predicated region
        $region65: #{tpu_custom_call.1} parent=63 // pred_check
          %p465 = pneg %p54
        $region66: #{tpu_custom_call.1} parent=63 // pred_check_branch
          %467 = sbr.rel (%p465) target = $region68
        $region67: #{tpu_custom_call.1} parent=63 // pred_region
          %469 = dma.done %s461, 256
        $region68: #{tpu_custom_call.1} parent=63 // pred_fallthru
          _
        %s470 = sand.u32 %s33, 1
        %s471 = scalar_lea.sflag [#allocation7], %s470
        %s472 = sand.u32 %s67, 1
        %s473 = smul.addr %s472, 16
        %s474 = scalar_lea.vmem [#allocation6], %s473
        // Predicated region
        $region69: #{tpu_custom_call.1} parent=63 // pred_check
          %p475 = pneg %p80
        $region70: #{tpu_custom_call.1} parent=63 // pred_check_branch
          %477 = sbr.rel (%p475) target = $region72
        $region71: #{tpu_custom_call.1} parent=63 // pred_region
          %479 = dma.done %s471, 256
        $region72: #{tpu_custom_call.1} parent=63 // pred_fallthru
          _
        %s480 = sand.u32 %s33, 1
        %s481 = scalar_lea.sflag [#allocation7], %s480
        %s482 = sand.u32 %s93, 1
        %s483 = smul.addr %s482, 16
        %s484 = scalar_lea.vmem [#allocation8], %s483
        // Predicated region
        $region73: #{tpu_custom_call.1} parent=63 // pred_check
          %p485 = pneg %p106
        $region74: #{tpu_custom_call.1} parent=63 // pred_check_branch
          %487 = sbr.rel (%p485) target = $region76
        $region75: #{tpu_custom_call.1} parent=63 // pred_region
          %489 = dma.done %s481, 256
        $region76: #{tpu_custom_call.1} parent=63 // pred_fallthru
          _
        // Predicated region
        $region77: #{tpu_custom_call.1} parent=63 // pred_check
          %p490 = pneg %p127
        $region78: #{tpu_custom_call.1} parent=63 // pred_check_branch
          %492 = sbr.rel (%p490) target = $region80
        $region79: #{tpu_custom_call.1} parent=63 // pred_region
          %494 = dma.done [#allocation10], 256
        $region80: #{tpu_custom_call.1} parent=63 // pred_fallthru
          _
        // Predicated region
        $region81: #{tpu_custom_call.1} parent=63 // pred_check
          %p495 = pneg %p169
        $region82: #{tpu_custom_call.1} parent=63 // pred_check_branch
          %497 = sbr.rel (%p495) target = $region84
        $region83: #{tpu_custom_call.1} parent=63 // pred_region
          %499 = dma.done [#allocation10], 256
        $region84: #{tpu_custom_call.1} parent=63 // pred_fallthru
          _
        // Predicated region
        $region85: #{tpu_custom_call.1} parent=63 // pred_check
          %p500 = pneg %p211
        $region86: #{tpu_custom_call.1} parent=63 // pred_check_branch
          %502 = sbr.rel (%p500) target = $region88
        $region87: #{tpu_custom_call.1} parent=63 // pred_region
          %504 = dma.done [#allocation13], 256
        $region88: #{tpu_custom_call.1} parent=63 // pred_fallthru
          _
        // Predicated region
        $region89: #{tpu_custom_call.1} parent=63 // pred_check
          %p505 = pneg %p253
        $region90: #{tpu_custom_call.1} parent=63 // pred_check_branch
          %507 = sbr.rel (%p505) target = $region92
        $region91: #{tpu_custom_call.1} parent=63 // pred_region
          %509 = dma.done [#allocation13], 256
        $region92: #{tpu_custom_call.1} parent=63 // pred_fallthru
          _
        %s510 = sand.u32 %s41, 1
        %s511 = scalar_lea.sflag [#allocation4], %s510
        %s512 = sand.u32 %s41, 1
        %s513 = smul.addr %s512, 16
        %s514 = scalar_lea.vmem [#allocation3], %s513
        %p515 = pneg %p54
        %p516 = pneg %p51
        %s517 = sand.u32 %s33, 1
        %s518 = scalar_lea.sflag [#allocation7], %s517
        %s519 = sand.u32 %s67, 1
        %s520 = smul.addr %s519, 16
        %s521 = scalar_lea.vmem [#allocation6], %s520
        %p522 = pneg %p80
        %p523 = pneg %p77
        %s524 = sand.u32 %s33, 1
        %s525 = scalar_lea.sflag [#allocation7], %s524
        %s526 = sand.u32 %s93, 1
        %s527 = smul.addr %s526, 16
        %s528 = scalar_lea.vmem [#allocation8], %s527
        %p529 = pneg %p106
        %p530 = pneg %p103
        %p531 = pneg %p127
        %p532 = pneg %p124
        %p533 = pneg %p148
        %p534 = pneg %p145
        %p535 = pneg %p169
        %p536 = pneg %p166
        %p537 = pneg %p190
        %p538 = pneg %p187
        %p539 = pneg %p211
        %p540 = pneg %p208
        %p541 = pneg %p232
        %p542 = pneg %p229
        %p543 = pneg %p253
        %p544 = pneg %p250
        %p545 = pneg %p274
        %p546 = pneg %p271
        %p547 = pneg %p300
        %p548 = pneg %p297
        %s549 = sand.u32 %s287, 1
        %s550 = scalar_lea.sflag [#allocation5], %s549
        %s551 = sand.u32 %s287, 1
        %s552 = smul.addr %s551, 16
        %s553 = scalar_lea.vmem [#allocation15], %s552
        %s554 = smul.u32 2, %s33
        %s555 = smul.u32 2, %s33
        %s556 = smul.u32 2, %s33
        %s557 = smul.u32 2, %s33
        %v559 = vld [vmem:[%s464] sm:$0xff]
        %v560 = vld [vmem:[%s464 + $0x8] sm:$0xff]
        %v561 = vpack.c.bf16 %v560, %v559
        %v562 = vld [vmem:[%s474] sm:$0xff]
        %v563 = vld [vmem:[%s474 + $0x8] sm:$0xff]
        %v564 = vpack.c.bf16 %v563, %v562
        %v565 = vld [vmem:[%s484] sm:$0xff]
        %v566 = vld [vmem:[%s484 + $0x8] sm:$0xff]
        %v567 = vpack.c.bf16 %v566, %v565
        %v568 = vld [vmem:[#allocation9] sm:$0xf]
        %v569 = vld [vmem:[#allocation9 + $0x4] sm:$0xf]
        %v570 = vld [vmem:[#allocation9 + $0x8] sm:$0xf]
        %v571 = vld [vmem:[#allocation9 + $0xc] sm:$0xf]
        %v572 = vld [vmem:[%s4] sm:$0x1]
        %v574 = vperm.slane %v572, 0
        %v580 = vunpack.c.l.b16 %v568
        %v581 = vunpack.c.l.b16 %v569
        %v582 = vunpack.c.l.b16 %v570
        %v583 = vunpack.c.l.b16 %v571
        %v584 = vpack.c.b16 %v581, %v580
        %v585 = vpack.c.b16 %v583, %v582
        %vm588 = vcmask 261120
        %v590 = vsel %vm588, %v561, 0
        %592 = vmatpush.bf16.msra.mxu0 0
        %593 = vmatpush.bf16.msra.mxu0 0
        %594 = vmatpush.bf16.msra.mxu0 0
        %595 = vmatpush.bf16.msra.mxu0 0
        %596 = vmatpush.bf16.msra.mxu0 0
        %597 = vmatpush.bf16.msra.mxu0 0
        %598 = vmatpush.bf16.msra.mxu0 %v585
        %599 = vmatpush.bf16.msra.mxu0 %v584
        %600 = vmatmul.bf16.gmra.mxu0 %v590
        %v601 = vpop.f32.mrf.mxu0
        %v602 = vadd.f32 %v574, %v601
        %v603 = vpop.f32.mrf.mxu0
        %v604 = vadd.f32 %v574, %v603
        %605 = vdwg.mxu0
        %v606 = vld [vmem:[#allocation11] sm:$0xf]
        %v607 = vld [vmem:[#allocation11 + $0x4] sm:$0xf]
        %v608 = vld [vmem:[#allocation11 + $0x8] sm:$0xf]
        %v609 = vld [vmem:[#allocation11 + $0xc] sm:$0xf]
        %v610 = vld [vmem:[%s6] sm:$0x1]
        %v612 = vperm.slane %v610, 0
        %v618 = vunpack.c.l.b16 %v606
        %v619 = vunpack.c.l.b16 %v607
        %v620 = vunpack.c.l.b16 %v608
        %v621 = vunpack.c.l.b16 %v609
        %v622 = vpack.c.b16 %v619, %v618
        %v623 = vpack.c.b16 %v621, %v620
        %v627 = vsel %vm588, %v564, 0
        %629 = vmatpush.bf16.msra.mxu0 0
        %630 = vmatpush.bf16.msra.mxu0 0
        %631 = vmatpush.bf16.msra.mxu0 0
        %632 = vmatpush.bf16.msra.mxu0 0
        %633 = vmatpush.bf16.msra.mxu0 0
        %634 = vmatpush.bf16.msra.mxu0 0
        %635 = vmatpush.bf16.msra.mxu0 %v623
        %636 = vmatpush.bf16.msra.mxu0 %v622
        %637 = vmatmul.bf16.gmra.mxu0 %v627
        %v638 = vpop.f32.mrf.mxu0
        %v639 = vadd.f32 %v612, %v638
        %v640 = vpop.f32.mrf.mxu0
        %v641 = vadd.f32 %v612, %v640
        %642 = vdwg.mxu0
        %v643 = vld [vmem:[#allocation12] sm:$0xf]
        %v644 = vld [vmem:[#allocation12 + $0x4] sm:$0xf]
        %v645 = vld [vmem:[#allocation12 + $0x8] sm:$0xf]
        %v646 = vld [vmem:[#allocation12 + $0xc] sm:$0xf]
        %v647 = vld [vmem:[%s8] sm:$0x1]
        %v649 = vperm.slane %v647, 0
        %v655 = vunpack.c.l.b16 %v643
        %v656 = vunpack.c.l.b16 %v644
        %v657 = vunpack.c.l.b16 %v645
        %v658 = vunpack.c.l.b16 %v646
        %v659 = vpack.c.b16 %v656, %v655
        %v660 = vpack.c.b16 %v658, %v657
        %v664 = vsel %vm588, %v567, 0
        %666 = vmatpush.bf16.msra.mxu0 0
        %667 = vmatpush.bf16.msra.mxu0 0
        %668 = vmatpush.bf16.msra.mxu0 0
        %669 = vmatpush.bf16.msra.mxu0 0
        %670 = vmatpush.bf16.msra.mxu0 0
        %671 = vmatpush.bf16.msra.mxu0 0
        %672 = vmatpush.bf16.msra.mxu0 %v660
        %673 = vmatpush.bf16.msra.mxu0 %v659
        %674 = vmatmul.bf16.gmra.mxu0 %v664
        %v675 = vpop.f32.mrf.mxu0
        %v676 = vadd.f32 %v649, %v675
        %v677 = vpop.f32.mrf.mxu0
        %v678 = vadd.f32 %v649, %v677
        %679 = vdwg.mxu0
        %v680 = vpack.c.bf16 %v602, %v602
        %v681 = vpack.c.bf16 %v604, %v604
        %v682 = vpack.c.bf16 %v639, %v639
        %v683 = vpack.c.bf16 %v641, %v641
        %v684 = vpack.c.bf16 %v676, %v676
        %v685 = vpack.c.bf16 %v678, %v678
        %vm686 = vcmask 64512
        %v688 = vsel %vm686, %v680, 0
        %v691 = vsel %vm686, %v682, 0
        %693 = vmatpush.bf16.xpose.msra.mxu0 0
        %694 = vmatpush.bf16.xpose.msra.mxu0 0
        %695 = vmatpush.bf16.xpose.msra.mxu0 0
        %696 = vmatpush.bf16.xpose.msra.mxu0 0
        %697 = vmatpush.bf16.xpose.msra.mxu0 0
        %698 = vmatpush.bf16.xpose.msra.mxu0 0
        %699 = vmatpush.bf16.xpose.msra.mxu0 0
        %700 = vmatpush.bf16.xpose.msra.mxu0 %v691
        %701 = vmatmul.bf16.gmra.mxu0 %v688
        %v702 = vpop.f32.mrf.mxu0
        %v703 = vadd.f32 0.0, %v702
        %v704 = vpop.f32.mrf.mxu0
        %705 = vdwg.mxu0
        %v707 = vsel %vm686, %v681, 0
        %v710 = vsel %vm686, %v683, 0
        %712 = vmatpush.bf16.xpose.msra.mxu0 0
        %713 = vmatpush.bf16.xpose.msra.mxu0 0
        %714 = vmatpush.bf16.xpose.msra.mxu0 0
        %715 = vmatpush.bf16.xpose.msra.mxu0 0
        %716 = vmatpush.bf16.xpose.msra.mxu0 0
        %717 = vmatpush.bf16.xpose.msra.mxu0 0
        %718 = vmatpush.bf16.xpose.msra.mxu0 0
        %719 = vmatpush.bf16.xpose.msra.mxu0 %v710
        %720 = vmatmul.bf16.gmra.mxu0 %v707
        %v721 = vpop.f32.mrf.mxu0
        %v722 = vadd.f32 0.0, %v721
        %v723 = vpop.f32.mrf.mxu0
        %724 = vdwg.mxu0
        %v725 = vsel %vm686, %v703, -inf
        %726 = vmax.xlane.f32.xlu0 %v725
        %v727 = vpop.xlane.xlu0 %726
        %v728 = vsel %vm686, %v722, -inf
        %729 = vmax.xlane.f32.xlu0 %v728
        %v730 = vpop.xlane.xlu0 %729
        %v731 = vsub.f32 %v703, %v727
        %v732 = vsub.f32 %v722, %v730
        %v733 = vmul.f32 %v731, 1.442695
        %v734 = vpow.pop %v733
        %v735 = vmul.f32 %v732, 1.442695
        %v736 = vpow.pop %v735
        %v737 = vsel %vm686, %v734, 0.0
        %738 = vadd.xlane.f32.xlu0 %v737
        %v739 = vpop.xlane.xlu0 %738
        %v740 = vsel %vm686, %v736, 0.0
        %741 = vadd.xlane.f32.xlu0 %v740
        %v742 = vpop.xlane.xlu0 %741
        %v743 = vrcp.pop %v739
        %v744 = vrcp.pop %v742
        %v745 = vmul.f32 %v734, %v743
        %v746 = vmul.f32 %v736, %v744
        %v747 = vpack.c.bf16 %v745, %v745
        %v748 = vpack.c.bf16 %v746, %v746
        %v750 = vsel %vm686, %v747, 0
        %vm752 = vcmask 1043456
        %v754 = vsel %vm752, %v684, 0
        %756 = vmatpush.bf16.msra.mxu0 0
        %757 = vmatpush.bf16.msra.mxu0 0
        %758 = vmatpush.bf16.msra.mxu0 0
        %759 = vmatpush.bf16.msra.mxu0 0
        %760 = vmatpush.bf16.msra.mxu0 0
        %761 = vmatpush.bf16.msra.mxu0 0
        %762 = vmatpush.bf16.msra.mxu0 0
        %763 = vmatpush.bf16.msra.mxu0 %v754
        %764 = vmatmul.bf16.gmra.mxu0 %v750
        %v765 = vpop.f32.mrf.mxu0
        %v766 = vadd.f32 0.0, %v765
        %v767 = vpop.f32.mrf.mxu0
        %768 = vdwg.mxu0
        %v770 = vsel %vm686, %v748, 0
        %v773 = vsel %vm752, %v685, 0
        %775 = vmatpush.bf16.msra.mxu0 0
        %776 = vmatpush.bf16.msra.mxu0 0
        %777 = vmatpush.bf16.msra.mxu0 0
        %778 = vmatpush.bf16.msra.mxu0 0
        %779 = vmatpush.bf16.msra.mxu0 0
        %780 = vmatpush.bf16.msra.mxu0 0
        %781 = vmatpush.bf16.msra.mxu0 0
        %782 = vmatpush.bf16.msra.mxu0 %v773
        %783 = vmatmul.bf16.gmra.mxu0 %v770
        %v784 = vpop.f32.mrf.mxu0
        %v785 = vadd.f32 0.0, %v784
        %v786 = vpop.f32.mrf.mxu0
        %787 = vdwg.mxu0
        %788 = vst.msk [vmem:[#allocation2] sm:$0xff] %vm686, %v766
        %789 = vst.msk [vmem:[#allocation2 + $0x8] sm:$0xff] %vm686, %v785
        %v791 = vunpack.c.l.b16 %v680
        %v792 = vpack.c.b16 %v791, %v791
        %793 = vrot.lane.b32.xlu0 %v792, 120
        %v794 = vpop.permute.xlu0 %793
        %v796 = vunpack.c.l.b16 %v682
        %v797 = vpack.c.b16 %v796, %v796
        %798 = vrot.lane.b32.xlu0 %v797, 120
        %v799 = vpop.permute.xlu0 %798
        %v801 = vsel %vm686, %v794, 0
        %v804 = vsel %vm686, %v799, 0
        %806 = vmatpush.bf16.xpose.msra.mxu0 0
        %807 = vmatpush.bf16.xpose.msra.mxu0 0
        %808 = vmatpush.bf16.xpose.msra.mxu0 0
        %809 = vmatpush.bf16.xpose.msra.mxu0 0
        %810 = vmatpush.bf16.xpose.msra.mxu0 0
        %811 = vmatpush.bf16.xpose.msra.mxu0 0
        %812 = vmatpush.bf16.xpose.msra.mxu0 0
        %813 = vmatpush.bf16.xpose.msra.mxu0 %v804
        %814 = vmatmul.bf16.gmra.mxu0 %v801
        %v815 = vpop.f32.mrf.mxu0
        %v816 = vadd.f32 0.0, %v815
        %v817 = vpop.f32.mrf.mxu0
        %818 = vdwg.mxu0
        %v820 = vunpack.c.l.b16 %v681
        %v821 = vpack.c.b16 %v820, %v820
        %822 = vrot.lane.b32.xlu0 %v821, 120
        %v823 = vpop.permute.xlu0 %822
        %v825 = vunpack.c.l.b16 %v683
        %v826 = vpack.c.b16 %v825, %v825
        %827 = vrot.lane.b32.xlu0 %v826, 120
        %v828 = vpop.permute.xlu0 %827
        %v830 = vsel %vm686, %v823, 0
        %v833 = vsel %vm686, %v828, 0
        %835 = vmatpush.bf16.xpose.msra.mxu0 0
        %836 = vmatpush.bf16.xpose.msra.mxu0 0
        %837 = vmatpush.bf16.xpose.msra.mxu0 0
        %838 = vmatpush.bf16.xpose.msra.mxu0 0
        %839 = vmatpush.bf16.xpose.msra.mxu0 0
        %840 = vmatpush.bf16.xpose.msra.mxu0 0
        %841 = vmatpush.bf16.xpose.msra.mxu0 0
        %842 = vmatpush.bf16.xpose.msra.mxu0 %v833
        %843 = vmatmul.bf16.gmra.mxu0 %v830
        %v844 = vpop.f32.mrf.mxu0
        %v845 = vadd.f32 0.0, %v844
        %v846 = vpop.f32.mrf.mxu0
        %847 = vdwg.mxu0
        %v848 = vsel %vm686, %v816, -inf
        %849 = vmax.xlane.f32.xlu0 %v848
        %v850 = vpop.xlane.xlu0 %849
        %v851 = vsel %vm686, %v845, -inf
        %852 = vmax.xlane.f32.xlu0 %v851
        %v853 = vpop.xlane.xlu0 %852
        %v854 = vsub.f32 %v816, %v850
        %v855 = vsub.f32 %v845, %v853
        %v856 = vmul.f32 %v854, 1.442695
        %v857 = vpow.pop %v856
        %v858 = vmul.f32 %v855, 1.442695
        %v859 = vpow.pop %v858
        %v860 = vsel %vm686, %v857, 0.0
        %861 = vadd.xlane.f32.xlu0 %v860
        %v862 = vpop.xlane.xlu0 %861
        %v863 = vsel %vm686, %v859, 0.0
        %864 = vadd.xlane.f32.xlu0 %v863
        %v865 = vpop.xlane.xlu0 %864
        %v866 = vrcp.pop %v862
        %v867 = vrcp.pop %v865
        %v868 = vmul.f32 %v857, %v866
        %v869 = vmul.f32 %v859, %v867
        %v870 = vpack.c.bf16 %v868, %v868
        %v871 = vpack.c.bf16 %v869, %v869
        %v873 = vunpack.c.l.b16 %v684
        %v874 = vpack.c.b16 %v873, %v873
        %875 = vrot.lane.b32.xlu0 %v874, 120
        %v876 = vpop.permute.xlu0 %875
        %v878 = vsel %vm686, %v870, 0
        %v881 = vsel %vm752, %v876, 0
        %883 = vmatpush.bf16.msra.mxu0 0
        %884 = vmatpush.bf16.msra.mxu0 0
        %885 = vmatpush.bf16.msra.mxu0 0
        %886 = vmatpush.bf16.msra.mxu0 0
        %887 = vmatpush.bf16.msra.mxu0 0
        %888 = vmatpush.bf16.msra.mxu0 0
        %889 = vmatpush.bf16.msra.mxu0 0
        %890 = vmatpush.bf16.msra.mxu0 %v881
        %891 = vmatmul.bf16.gmra.mxu0 %v878
        %v892 = vpop.f32.mrf.mxu0
        %v893 = vadd.f32 0.0, %v892
        %v894 = vpop.f32.mrf.mxu0
        %895 = vdwg.mxu0
        %v897 = vunpack.c.l.b16 %v685
        %v898 = vpack.c.b16 %v897, %v897
        %899 = vrot.lane.b32.xlu0 %v898, 120
        %v900 = vpop.permute.xlu0 %899
        %v902 = vsel %vm686, %v871, 0
        %v905 = vsel %vm752, %v900, 0
        %907 = vmatpush.bf16.msra.mxu0 0
        %908 = vmatpush.bf16.msra.mxu0 0
        %909 = vmatpush.bf16.msra.mxu0 0
        %910 = vmatpush.bf16.msra.mxu0 0
        %911 = vmatpush.bf16.msra.mxu0 0
        %912 = vmatpush.bf16.msra.mxu0 0
        %913 = vmatpush.bf16.msra.mxu0 0
        %914 = vmatpush.bf16.msra.mxu0 %v905
        %915 = vmatmul.bf16.gmra.mxu0 %v902
        %v916 = vpop.f32.mrf.mxu0
        %v917 = vadd.f32 0.0, %v916
        %v918 = vpop.f32.mrf.mxu0
        %919 = vdwg.mxu0
        %922 = vrot.lane.b32.xlu0 %v893, 8
        %v923 = vpop.permute.xlu0 %922
        %924 = vrot.lane.b32.xlu0 %v917, 8
        %v925 = vpop.permute.xlu0 %924
        %vm928 = vcmask 130112
        %929 = vst.msk [vmem:[#allocation2] sm:$0xff] %vm928, %v923
        %930 = vst.msk [vmem:[#allocation2 + $0x8] sm:$0xff] %vm928, %v925
        %931 = vrot.lane.b32.xlu0 %v792, 112
        %v932 = vpop.permute.xlu0 %931
        %933 = vrot.lane.b32.xlu0 %v797, 112
        %v934 = vpop.permute.xlu0 %933
        %v936 = vsel %vm686, %v932, 0
        %v939 = vsel %vm686, %v934, 0
        %941 = vmatpush.bf16.xpose.msra.mxu0 0
        %942 = vmatpush.bf16.xpose.msra.mxu0 0
        %943 = vmatpush.bf16.xpose.msra.mxu0 0
        %944 = vmatpush.bf16.xpose.msra.mxu0 0
        %945 = vmatpush.bf16.xpose.msra.mxu0 0
        %946 = vmatpush.bf16.xpose.msra.mxu0 0
        %947 = vmatpush.bf16.xpose.msra.mxu0 0
        %948 = vmatpush.bf16.xpose.msra.mxu0 %v939
        %949 = vmatmul.bf16.gmra.mxu0 %v936
        %v950 = vpop.f32.mrf.mxu0
        %v951 = vadd.f32 0.0, %v950
        %v952 = vpop.f32.mrf.mxu0
        %953 = vdwg.mxu0
        %954 = vrot.lane.b32.xlu0 %v821, 112
        %v955 = vpop.permute.xlu0 %954
        %956 = vrot.lane.b32.xlu0 %v826, 112
        %v957 = vpop.permute.xlu0 %956
        %v959 = vsel %vm686, %v955, 0
        %v962 = vsel %vm686, %v957, 0
        %964 = vmatpush.bf16.xpose.msra.mxu0 0
        %965 = vmatpush.bf16.xpose.msra.mxu0 0
        %966 = vmatpush.bf16.xpose.msra.mxu0 0
        %967 = vmatpush.bf16.xpose.msra.mxu0 0
        %968 = vmatpush.bf16.xpose.msra.mxu0 0
        %969 = vmatpush.bf16.xpose.msra.mxu0 0
        %970 = vmatpush.bf16.xpose.msra.mxu0 0
        %971 = vmatpush.bf16.xpose.msra.mxu0 %v962
        %972 = vmatmul.bf16.gmra.mxu0 %v959
        %v973 = vpop.f32.mrf.mxu0
        %v974 = vadd.f32 0.0, %v973
        %v975 = vpop.f32.mrf.mxu0
        %976 = vdwg.mxu0
        %v977 = vsel %vm686, %v951, -inf
        %978 = vmax.xlane.f32.xlu0 %v977
        %v979 = vpop.xlane.xlu0 %978
        %v980 = vsel %vm686, %v974, -inf
        %981 = vmax.xlane.f32.xlu0 %v980
        %v982 = vpop.xlane.xlu0 %981
        %v983 = vsub.f32 %v951, %v979
        %v984 = vsub.f32 %v974, %v982
        %v985 = vmul.f32 %v983, 1.442695
        %v986 = vpow.pop %v985
        %v987 = vmul.f32 %v984, 1.442695
        %v988 = vpow.pop %v987
        %v989 = vsel %vm686, %v986, 0.0
        %990 = vadd.xlane.f32.xlu0 %v989
        %v991 = vpop.xlane.xlu0 %990
        %v992 = vsel %vm686, %v988, 0.0
        %993 = vadd.xlane.f32.xlu0 %v992
        %v994 = vpop.xlane.xlu0 %993
        %v995 = vrcp.pop %v991
        %v996 = vrcp.pop %v994
        %v997 = vmul.f32 %v986, %v995
        %v998 = vmul.f32 %v988, %v996
        %v999 = vpack.c.bf16 %v997, %v997
        %v1000 = vpack.c.bf16 %v998, %v998
        %1001 = vrot.lane.b32.xlu0 %v874, 112
        %v1002 = vpop.permute.xlu0 %1001
        %v1004 = vsel %vm686, %v999, 0
        %v1007 = vsel %vm752, %v1002, 0
        %1009 = vmatpush.bf16.msra.mxu0 0
        %1010 = vmatpush.bf16.msra.mxu0 0
        %1011 = vmatpush.bf16.msra.mxu0 0
        %1012 = vmatpush.bf16.msra.mxu0 0
        %1013 = vmatpush.bf16.msra.mxu0 0
        %1014 = vmatpush.bf16.msra.mxu0 0
        %1015 = vmatpush.bf16.msra.mxu0 0
        %1016 = vmatpush.bf16.msra.mxu0 %v1007
        %1017 = vmatmul.bf16.gmra.mxu0 %v1004
        %v1018 = vpop.f32.mrf.mxu0
        %v1019 = vadd.f32 0.0, %v1018
        %v1020 = vpop.f32.mrf.mxu0
        %1021 = vdwg.mxu0
        %1022 = vrot.lane.b32.xlu0 %v898, 112
        %v1023 = vpop.permute.xlu0 %1022
        %v1025 = vsel %vm686, %v1000, 0
        %v1028 = vsel %vm752, %v1023, 0
        %1030 = vmatpush.bf16.msra.mxu0 0
        %1031 = vmatpush.bf16.msra.mxu0 0
        %1032 = vmatpush.bf16.msra.mxu0 0
        %1033 = vmatpush.bf16.msra.mxu0 0
        %1034 = vmatpush.bf16.msra.mxu0 0
        %1035 = vmatpush.bf16.msra.mxu0 0
        %1036 = vmatpush.bf16.msra.mxu0 0
        %1037 = vmatpush.bf16.msra.mxu0 %v1028
        %1038 = vmatmul.bf16.gmra.mxu0 %v1025
        %v1039 = vpop.f32.mrf.mxu0
        %v1040 = vadd.f32 0.0, %v1039
        %v1041 = vpop.f32.mrf.mxu0
        %1042 = vdwg.mxu0
        %1045 = vrot.lane.b32.xlu0 %v1019, 16
        %v1046 = vpop.permute.xlu0 %1045
        %1047 = vrot.lane.b32.xlu0 %v1040, 16
        %v1048 = vpop.permute.xlu0 %1047
        %vm1051 = vcmask 195712
        %1052 = vst.msk [vmem:[#allocation2] sm:$0xff] %vm1051, %v1046
        %1053 = vst.msk [vmem:[#allocation2 + $0x8] sm:$0xff] %vm1051, %v1048
        %1054 = vrot.lane.b32.xlu0 %v792, 104
        %v1055 = vpop.permute.xlu0 %1054
        %1056 = vrot.lane.b32.xlu0 %v797, 104
        %v1057 = vpop.permute.xlu0 %1056
        %v1059 = vsel %vm686, %v1055, 0
        %v1062 = vsel %vm686, %v1057, 0
        %1064 = vmatpush.bf16.xpose.msra.mxu0 0
        %1065 = vmatpush.bf16.xpose.msra.mxu0 0
        %1066 = vmatpush.bf16.xpose.msra.mxu0 0
        %1067 = vmatpush.bf16.xpose.msra.mxu0 0
        %1068 = vmatpush.bf16.xpose.msra.mxu0 0
        %1069 = vmatpush.bf16.xpose.msra.mxu0 0
        %1070 = vmatpush.bf16.xpose.msra.mxu0 0
        %1071 = vmatpush.bf16.xpose.msra.mxu0 %v1062
        %1072 = vmatmul.bf16.gmra.mxu0 %v1059
        %v1073 = vpop.f32.mrf.mxu0
        %v1074 = vadd.f32 0.0, %v1073
        %v1075 = vpop.f32.mrf.mxu0
        %1076 = vdwg.mxu0
        %1077 = vrot.lane.b32.xlu0 %v821, 104
        %v1078 = vpop.permute.xlu0 %1077
        %1079 = vrot.lane.b32.xlu0 %v826, 104
        %v1080 = vpop.permute.xlu0 %1079
        %v1082 = vsel %vm686, %v1078, 0
        %v1085 = vsel %vm686, %v1080, 0
        %1087 = vmatpush.bf16.xpose.msra.mxu0 0
        %1088 = vmatpush.bf16.xpose.msra.mxu0 0
        %1089 = vmatpush.bf16.xpose.msra.mxu0 0
        %1090 = vmatpush.bf16.xpose.msra.mxu0 0
        %1091 = vmatpush.bf16.xpose.msra.mxu0 0
        %1092 = vmatpush.bf16.xpose.msra.mxu0 0
        %1093 = vmatpush.bf16.xpose.msra.mxu0 0
        %1094 = vmatpush.bf16.xpose.msra.mxu0 %v1085
        %1095 = vmatmul.bf16.gmra.mxu0 %v1082
        %v1096 = vpop.f32.mrf.mxu0
        %v1097 = vadd.f32 0.0, %v1096
        %v1098 = vpop.f32.mrf.mxu0
        %1099 = vdwg.mxu0
        %v1100 = vsel %vm686, %v1074, -inf
        %1101 = vmax.xlane.f32.xlu0 %v1100
        %v1102 = vpop.xlane.xlu0 %1101
        %v1103 = vsel %vm686, %v1097, -inf
        %1104 = vmax.xlane.f32.xlu0 %v1103
        %v1105 = vpop.xlane.xlu0 %1104
        %v1106 = vsub.f32 %v1074, %v1102
        %v1107 = vsub.f32 %v1097, %v1105
        %v1108 = vmul.f32 %v1106, 1.442695
        %v1109 = vpow.pop %v1108
        %v1110 = vmul.f32 %v1107, 1.442695
        %v1111 = vpow.pop %v1110
        %v1112 = vsel %vm686, %v1109, 0.0
        %1113 = vadd.xlane.f32.xlu0 %v1112
        %v1114 = vpop.xlane.xlu0 %1113
        %v1115 = vsel %vm686, %v1111, 0.0
        %1116 = vadd.xlane.f32.xlu0 %v1115
        %v1117 = vpop.xlane.xlu0 %1116
        %v1118 = vrcp.pop %v1114
        %v1119 = vrcp.pop %v1117
        %v1120 = vmul.f32 %v1109, %v1118
        %v1121 = vmul.f32 %v1111, %v1119
        %v1122 = vpack.c.bf16 %v1120, %v1120
        %v1123 = vpack.c.bf16 %v1121, %v1121
        %1124 = vrot.lane.b32.xlu0 %v874, 104
        %v1125 = vpop.permute.xlu0 %1124
        %v1127 = vsel %vm686, %v1122, 0
        %v1130 = vsel %vm752, %v1125, 0
        %1132 = vmatpush.bf16.msra.mxu0 0
        %1133 = vmatpush.bf16.msra.mxu0 0
        %1134 = vmatpush.bf16.msra.mxu0 0
        %1135 = vmatpush.bf16.msra.mxu0 0
        %1136 = vmatpush.bf16.msra.mxu0 0
        %1137 = vmatpush.bf16.msra.mxu0 0
        %1138 = vmatpush.bf16.msra.mxu0 0
        %1139 = vmatpush.bf16.msra.mxu0 %v1130
        %1140 = vmatmul.bf16.gmra.mxu0 %v1127
        %v1141 = vpop.f32.mrf.mxu0
        %v1142 = vadd.f32 0.0, %v1141
        %v1143 = vpop.f32.mrf.mxu0
        %1144 = vdwg.mxu0
        %1145 = vrot.lane.b32.xlu0 %v898, 104
        %v1146 = vpop.permute.xlu0 %1145
        %v1148 = vsel %vm686, %v1123, 0
        %v1151 = vsel %vm752, %v1146, 0
        %1153 = vmatpush.bf16.msra.mxu0 0
        %1154 = vmatpush.bf16.msra.mxu0 0
        %1155 = vmatpush.bf16.msra.mxu0 0
        %1156 = vmatpush.bf16.msra.mxu0 0
        %1157 = vmatpush.bf16.msra.mxu0 0
        %1158 = vmatpush.bf16.msra.mxu0 0
        %1159 = vmatpush.bf16.msra.mxu0 0
        %1160 = vmatpush.bf16.msra.mxu0 %v1151
        %1161 = vmatmul.bf16.gmra.mxu0 %v1148
        %v1162 = vpop.f32.mrf.mxu0
        %v1163 = vadd.f32 0.0, %v1162
        %v1164 = vpop.f32.mrf.mxu0
        %1165 = vdwg.mxu0
        %1168 = vrot.lane.b32.xlu0 %v1142, 24
        %v1169 = vpop.permute.xlu0 %1168
        %1170 = vrot.lane.b32.xlu0 %v1163, 24
        %v1171 = vpop.permute.xlu0 %1170
        %vm1174 = vcmask 261312
        %1175 = vst.msk [vmem:[#allocation2] sm:$0xff] %vm1174, %v1169
        %1176 = vst.msk [vmem:[#allocation2 + $0x8] sm:$0xff] %vm1174, %v1171
        %v1177 = vld [vmem:[#allocation2] sm:$0xff]
        %v1178 = vld [vmem:[#allocation2 + $0x8] sm:$0xff]
        %v1179 = vpack.c.bf16 %v1178, %v1177
        %v1180 = vld [vmem:[#allocation14] sm:$0xf]
        %v1181 = vld [vmem:[#allocation14 + $0x4] sm:$0xf]
        %v1182 = vld [vmem:[#allocation14 + $0x8] sm:$0xf]
        %v1183 = vld [vmem:[#allocation14 + $0xc] sm:$0xf]
        %v1184 = vld [vmem:[%s10] sm:$0x1]
        %v1186 = vperm.slane %v1184, 0
        %v1192 = vunpack.c.l.b16 %v1180
        %v1193 = vunpack.c.l.b16 %v1181
        %v1194 = vunpack.c.l.b16 %v1182
        %v1195 = vunpack.c.l.b16 %v1183
        %v1196 = vpack.c.b16 %v1193, %v1192
        %v1197 = vpack.c.b16 %v1195, %v1194
        %v1201 = vsel %vm588, %v1179, 0
        %1203 = vmatpush.bf16.msra.mxu0 0
        %1204 = vmatpush.bf16.msra.mxu0 0
        %1205 = vmatpush.bf16.msra.mxu0 0
        %1206 = vmatpush.bf16.msra.mxu0 0
        %1207 = vmatpush.bf16.msra.mxu0 0
        %1208 = vmatpush.bf16.msra.mxu0 0
        %1209 = vmatpush.bf16.msra.mxu0 %v1197
        %1210 = vmatpush.bf16.msra.mxu0 %v1196
        %1211 = vmatmul.bf16.gmra.mxu0 %v1201
        %v1212 = vpop.f32.mrf.mxu0
        %v1213 = vadd.f32 %v1186, %v1212
        %v1214 = vpop.f32.mrf.mxu0
        %v1215 = vadd.f32 %v1186, %v1214
        %1216 = vdwg.mxu0
        %1217 = vst.msk [vmem:[%s553] sm:$0xff] %vm588, %v1213
        %1218 = vst.msk [vmem:[%s553 + $0x8] sm:$0xff] %vm588, %v1215
        %s1219 = sand.u32 %s287, 1
        %s1220 = scalar_lea.sflag [#allocation5], %s1219
        %s1221 = sand.u32 %s287, 1
        %s1222 = smul.addr %s1221, 16
        %s1223 = scalar_lea.vmem [#allocation15], %s1222
        // Predicated region
        $region93: #{tpu_custom_call.1} parent=63 // pred_check
          %p1224 = pneg %p297
        $region94: #{tpu_custom_call.1} parent=63 // pred_check_branch
          %1226 = sbr.rel (%p1224) target = $region96
        $region95: #{tpu_custom_call.1} parent=63 // pred_region
          %s1227 = smul.u32 2, %s33
          %1229 = vsyncadd %s1220, 0
          %s1230 = smul.addr %s1227, 8
          %s1231 = scalar_lea.hbm %s11, %s1230
          %s1232 = sshll.u32 %s1223, 4
          %s1233 = int_to_ptr.vmem [resolvable:$true] %s1232
          %s1234 = sshll.u32 %s1231, 4
          %s1235 = int_to_ptr.hbm [resolvable:$true] %s1234
          %1240 = dma.vmem_to_hbm [thread:$0]  %s1233, 256, %s1235, %s1220, 128, 128, 8
        $region96: #{tpu_custom_call.1} parent=63 // pred_fallthru
          _
      $region64: #{tpu_custom_call.1} parent=5 // pred_fallthru
        _
      %p1241 = scmp.le.s32.totalorder 2, %s28
      // Predicated region
      $region97: #{tpu_custom_call.1} parent=5 // pred_check
        %p1242 = pneg %p1241
      $region98: #{tpu_custom_call.1} parent=5 // pred_check_branch
        %1244 = sbr.rel (%p1242) target = $region100
      $region99: #{tpu_custom_call.1} parent=5 // pred_region
        %s1245 = ssub.s32 %s28, 2
        // Predicated region
        $region101: #{tpu_custom_call.1} parent=99 // pred_check
          %p1246 = pneg %p303
        $region102: #{tpu_custom_call.1} parent=99 // pred_check_branch
          %1248 = sbr.rel (%p1246) target = $region104
        $region103: #{tpu_custom_call.1} parent=99 // pred_region
          %s1249 = sand.u32 %s288, 1
          %s1250 = scalar_lea.sflag [#allocation5], %s1249
          %s1251 = sand.u32 %s288, 1
          %s1252 = smul.addr %s1251, 16
          %s1253 = scalar_lea.vmem [#allocation15], %s1252
          %1255 = dma.done %s1250, 256
        $region104: #{tpu_custom_call.1} parent=99 // pred_fallthru
          _
      $region100: #{tpu_custom_call.1} parent=5 // pred_fallthru
        _
    $region6: #{tpu_custom_call.1} parent=1 // loop_footer
      %s32 = sadd.s32 1, %s28
    $region7: #{tpu_custom_call.1} parent=1 // loop_footer_branch
      %27 = sbr.rel target = $region3
    $region8: #{tpu_custom_call.1} parent=1 // loop_exit
      _
    %1256 = vsyncpa [#allocation4], 1
    %s1257 = scalar_lea.sflag [#allocation4], 1
    %1258 = vsyncpa %s1257, 1
    %1259 = vsyncpa [#allocation7], 1
    %s1260 = scalar_lea.sflag [#allocation7], 1
    %1261 = vsyncpa %s1260, 1
    %1262 = vsyncpa [#allocation10], 1
    %1263 = vsyncpa [#allocation13], 1
    %1264 = vsyncpa [#allocation5], 1
    %s1265 = scalar_lea.sflag [#allocation5], 1
    %1266 = vsyncpa %s1265, 1

</llo_original>
